<compile_context>
chip_gen: v7x
topology: tpu7x:2x2x1
jax: 0.10.0
libtpu: 0.0.40
codegen_flags: <defaults>
</compile_context>

<pallas_src>
import jax
import jax.numpy as jnp
from jax.experimental import pallas as pl
from jax.experimental.pallas import tpu as pltpu


def encoder_lstm_kernel(ids_ref, emb_ref, wih_t_ref, b_ref, whh_t_ref,
                        out_ref, cn_ref):
    S, B, H = out_ref.shape
    Vp = emb_ref.shape[0]

    # ---- Fused embedding gather + input projection (off the serial path) ---
    # Gate table: (Vp, E) @ (E, 4H) + (1, 4H) -> (Vp, 4H), one MXU call.
    gtab = (jnp.dot(emb_ref[...], wih_t_ref[...],
                    preferred_element_type=jnp.float32) + b_ref[...])
    # One-hot gather of ALL S*B tokens: (S*B, Vp) @ (Vp, 4H) on the MXU.
    ids = ids_ref[...]                                        # (S*B, 1) int32
    onehot = (jax.lax.broadcasted_iota(jnp.int32, (S * B, Vp), 1)
              == ids).astype(jnp.float32)                     # (S*B, Vp)
    gates_x = jnp.dot(onehot, gtab,
                      preferred_element_type=jnp.float32)     # (S*B, 4H)

    whh_t = whh_t_ref[...]                                    # (H, 4H)

    # ---- Serial recurrence: fully unrolled (static S), h/c live in vregs ---
    h = jnp.zeros((B, H), jnp.float32)
    c = jnp.zeros((B, H), jnp.float32)
    for t in range(S):                          # S is static -> full unroll
        g = gates_x[t * B:(t + 1) * B, :] + jnp.dot(
            h, whh_t, preferred_element_type=jnp.float32)     # (B, 4H)
        # PyTorch LSTM gate order along 4H lanes: input, forget, cell(g), output.
        sg = jax.nn.sigmoid(g)     # one full-vreg EUP push (i, f, o lanes used)
        tg = jnp.tanh(g)           # one full-vreg EUP push (g lanes used)
        i_g = sg[:, 0 * H:1 * H]
        f_g = sg[:, 1 * H:2 * H]
        g_g = tg[:, 2 * H:3 * H]
        o_g = sg[:, 3 * H:4 * H]
        c = f_g * c + i_g * g_g
        h = o_g * jnp.tanh(c)
        out_ref[t] = h.astype(out_ref.dtype)   # per-step vst, hides under latency
    cn_ref[...] = c.astype(cn_ref.dtype)


def encoder_forward(src_input, emb_weight, w_ih, w_hh, b_ih, b_hh):
    """Replicates Encoder.forward(input, lengths=None, hidden=None)."""
    S, B, _ = src_input.shape
    V, E = emb_weight.shape
    H = w_hh.shape[1]

    # Wrapper-side, parameter-only layout prep (free / one-time):
    Vp = ((V + 127) // 128) * 128                             # lane-dense vocab pad
    emb_pad = jnp.zeros((Vp, E), jnp.float32).at[:V, :].set(
        emb_weight.astype(jnp.float32))                       # PAD row stays zero
    wih_t = jnp.transpose(w_ih).astype(jnp.float32)           # (E, 4H)
    whh_t = jnp.transpose(w_hh).astype(jnp.float32)           # (H, 4H)
    bias = (b_ih + b_hh)[None, :].astype(jnp.float32)         # (1, 4H)
    ids = src_input[:, :, 0].reshape(S * B, 1).astype(jnp.int32)

    vmem = pl.BlockSpec(memory_space=pltpu.MemorySpace.VMEM)
    outputs, c_n = pl.pallas_call(
        encoder_lstm_kernel,
        out_shape=(jax.ShapeDtypeStruct((S, B, H), jnp.float32),
                   jax.ShapeDtypeStruct((B, H), jnp.float32)),
        in_specs=[vmem, vmem, vmem, vmem, vmem],
        out_specs=(vmem, vmem),
    )(ids, emb_pad, wih_t, bias, whh_t)

    h_n = outputs[S - 1]                  # final hidden state == last output row
    hidden_t = (h_n[None], c_n[None])     # each (layers*num_dirs=1, B, H)
    return hidden_t, outputs              # outputs: (S, B, H) memory bank


def make_params(key, vocab, emb_size, hidden, pad_idx=0):
    """Deterministic synthetic parameters matching nn.Embedding + nn.LSTM shapes."""
    k_emb, k_wih, k_whh, k_bih, k_bhh = jax.random.split(key, 5)
    emb_weight = jax.random.normal(k_emb, (vocab, emb_size), jnp.float32) * 0.1
    emb_weight = emb_weight.at[pad_idx].set(0.0)    # padding_idx row is zeros

    bound = 1.0 / jnp.sqrt(hidden)
    w_ih = jax.random.uniform(k_wih, (4 * hidden, emb_size), jnp.float32, -bound, bound)
    w_hh = jax.random.uniform(k_whh, (4 * hidden, hidden), jnp.float32, -bound, bound)
    b_ih = jax.random.uniform(k_bih, (4 * hidden,), jnp.float32, -bound, bound)
    b_hh = jax.random.uniform(k_bhh, (4 * hidden,), jnp.float32, -bound, bound)
    return emb_weight, w_ih, w_hh, b_ih, b_hh


if __name__ == "__main__":
    SEQ, BATCH, NFEAT = 8, 8, 1
    VOCAB, EMB, HIDDEN = 50, 32, 32
    PAD = 0

    key = jax.random.PRNGKey(0)
    k_ids, k_params = jax.random.split(key)

    # input: len x batch x nfeat (LongTensor) — ints in [1, vocab) plus a PAD
    src_input = jax.random.randint(k_ids, (SEQ, BATCH, NFEAT), 1, VOCAB, jnp.int32)
    src_input = src_input.at[-1, 0, 0].set(PAD)

    params = make_params(k_params, VOCAB, EMB, HIDDEN, PAD)

    (h_n, c_n), outputs = jax.jit(encoder_forward)(src_input, *params)
    jax.block_until_ready((h_n, c_n, outputs))

    assert outputs.shape == (SEQ, BATCH, HIDDEN)
    assert h_n.shape == (1, BATCH, HIDDEN) and c_n.shape == (1, BATCH, HIDDEN)
    print("KERNEL_OK")
</pallas_src>

<mosaic_0001>
module attributes {stable_mosaic.version = 11 : i64} {
  func.func @encoder_lstm_kernel(%arg0: memref<64x1xi32, #tpu.memory_space<vmem>>, %arg1: memref<128x32xf32, #tpu.memory_space<vmem>>, %arg2: memref<32x128xf32, #tpu.memory_space<vmem>>, %arg3: memref<1x128xf32, #tpu.memory_space<vmem>>, %arg4: memref<32x128xf32, #tpu.memory_space<vmem>>, %arg5: memref<8x8x32xf32, #tpu.memory_space<vmem>>, %arg6: memref<8x32xf32, #tpu.memory_space<vmem>>) attributes {dimension_semantics = [], scalar_prefetch = 0 : i64, scratch_operands = 0 : i64, tpu.core_type = #tpu.core_type<tc>} {
    %c0 = arith.constant 0 : index
    %c0_0 = arith.constant 0 : index
    %0 = vector.load %arg1[%c0, %c0_0] : memref<128x32xf32, #tpu.memory_space<vmem>>, vector<128x32xf32>
    %c0_1 = arith.constant 0 : index
    %c0_2 = arith.constant 0 : index
    %1 = vector.load %arg2[%c0_1, %c0_2] : memref<32x128xf32, #tpu.memory_space<vmem>>, vector<32x128xf32>
    %cst = arith.constant dense<0.000000e+00> : vector<128x128xf32>
    %2 = tpu.matmul %0, %1, %cst {dimension_numbers = #tpu.dot_dimension_numbers<[1], [0], [0], [1], [0, 0, 1, 1], [], []>} : vector<128x32xf32>, vector<32x128xf32>, vector<128x128xf32> -> vector<128x128xf32>
    %c0_3 = arith.constant 0 : index
    %c0_4 = arith.constant 0 : index
    %3 = vector.load %arg3[%c0_3, %c0_4] : memref<1x128xf32, #tpu.memory_space<vmem>>, vector<1x128xf32>
    %4 = vector.broadcast %3 : vector<1x128xf32> to vector<128x128xf32>
    %5 = arith.addf %2, %4 : vector<128x128xf32>
    %c0_5 = arith.constant 0 : index
    %c0_6 = arith.constant 0 : index
    %6 = vector.load %arg0[%c0_5, %c0_6] : memref<64x1xi32, #tpu.memory_space<vmem>>, vector<64x1xi32>
    %7 = tpu.iota {dimensions = array<i32: 1>} : vector<64x128xi32>
    %8 = vector.broadcast %6 : vector<64x1xi32> to vector<64x128xi32>
    %9 = arith.cmpi eq, %7, %8 : vector<64x128xi32>
    %10 = arith.extui %9 : vector<64x128xi1> to vector<64x128xi32>
    %11 = arith.sitofp %10 : vector<64x128xi32> to vector<64x128xf32>
    %cst_7 = arith.constant dense<0.000000e+00> : vector<64x128xf32>
    %12 = tpu.matmul %11, %5, %cst_7 {dimension_numbers = #tpu.dot_dimension_numbers<[1], [0], [0], [1], [0, 0, 1, 1], [], []>} : vector<64x128xf32>, vector<128x128xf32>, vector<64x128xf32> -> vector<64x128xf32>
    %c0_8 = arith.constant 0 : index
    %c0_9 = arith.constant 0 : index
    %13 = vector.load %arg4[%c0_8, %c0_9] : memref<32x128xf32, #tpu.memory_space<vmem>>, vector<32x128xf32>
    %cst_10 = arith.constant 0.000000e+00 : f32
    %14 = vector.broadcast %cst_10 : f32 to vector<8x32xf32>
    %cst_11 = arith.constant 0.000000e+00 : f32
    %15 = vector.broadcast %cst_11 : f32 to vector<8x32xf32>
    %16 = vector.extract_strided_slice %12 {offsets = [0, 0], sizes = [8, 128], strides = [1, 1]} : vector<64x128xf32> to vector<8x128xf32>
    %cst_12 = arith.constant dense<0.000000e+00> : vector<8x128xf32>
    %17 = tpu.matmul %14, %13, %cst_12 {dimension_numbers = #tpu.dot_dimension_numbers<[1], [0], [0], [1], [0, 0, 1, 1], [], []>} : vector<8x32xf32>, vector<32x128xf32>, vector<8x128xf32> -> vector<8x128xf32>
    %18 = arith.addf %16, %17 : vector<8x128xf32>
    %19 = arith.negf %18 : vector<8x128xf32>
    %20 = math.exp %19 : vector<8x128xf32>
    %cst_13 = arith.constant 1.000000e+00 : f32
    %21 = vector.broadcast %cst_13 : f32 to vector<8x128xf32>
    %22 = arith.addf %21, %20 : vector<8x128xf32>
    %23 = arith.divf %21, %22 : vector<8x128xf32>
    %24 = math.tanh %18 : vector<8x128xf32>
    %25 = vector.extract_strided_slice %23 {offsets = [0, 0], sizes = [8, 32], strides = [1, 1]} : vector<8x128xf32> to vector<8x32xf32>
    %26 = vector.extract_strided_slice %23 {offsets = [0, 32], sizes = [8, 32], strides = [1, 1]} : vector<8x128xf32> to vector<8x32xf32>
    %27 = vector.extract_strided_slice %24 {offsets = [0, 64], sizes = [8, 32], strides = [1, 1]} : vector<8x128xf32> to vector<8x32xf32>
    %28 = vector.extract_strided_slice %23 {offsets = [0, 96], sizes = [8, 32], strides = [1, 1]} : vector<8x128xf32> to vector<8x32xf32>
    %29 = arith.mulf %26, %15 : vector<8x32xf32>
    %30 = arith.mulf %25, %27 : vector<8x32xf32>
    %31 = arith.addf %29, %30 : vector<8x32xf32>
    %32 = math.tanh %31 : vector<8x32xf32>
    %33 = arith.mulf %28, %32 : vector<8x32xf32>
    %c0_14 = arith.constant 0 : index
    %c0_15 = arith.constant 0 : index
    %c0_16 = arith.constant 0 : index
    %34 = vector.load %arg5[%c0_14, %c0_15, %c0_16] : memref<8x8x32xf32, #tpu.memory_space<vmem>>, vector<1x8x32xf32>
    %35 = vector.shape_cast %34 : vector<1x8x32xf32> to vector<8x32xf32>
    %36 = vector.shape_cast %33 : vector<8x32xf32> to vector<1x8x32xf32>
    tpu.vector_store %arg5[%c0_14, %c0_15, %c0_16], %36 {strides = array<i32>} : memref<8x8x32xf32, #tpu.memory_space<vmem>>, vector<1x8x32xf32>,
    %37 = vector.extract_strided_slice %12 {offsets = [8, 0], sizes = [8, 128], strides = [1, 1]} : vector<64x128xf32> to vector<8x128xf32>
    %cst_17 = arith.constant dense<0.000000e+00> : vector<8x128xf32>
    %38 = tpu.matmul %33, %13, %cst_17 {dimension_numbers = #tpu.dot_dimension_numbers<[1], [0], [0], [1], [0, 0, 1, 1], [], []>} : vector<8x32xf32>, vector<32x128xf32>, vector<8x128xf32> -> vector<8x128xf32>
    %39 = arith.addf %37, %38 : vector<8x128xf32>
    %40 = arith.negf %39 : vector<8x128xf32>
    %41 = math.exp %40 : vector<8x128xf32>
    %cst_18 = arith.constant 1.000000e+00 : f32
    %42 = vector.broadcast %cst_18 : f32 to vector<8x128xf32>
    %43 = arith.addf %42, %41 : vector<8x128xf32>
    %44 = arith.divf %42, %43 : vector<8x128xf32>
    %45 = math.tanh %39 : vector<8x128xf32>
    %46 = vector.extract_strided_slice %44 {offsets = [0, 0], sizes = [8, 32], strides = [1, 1]} : vector<8x128xf32> to vector<8x32xf32>
    %47 = vector.extract_strided_slice %44 {offsets = [0, 32], sizes = [8, 32], strides = [1, 1]} : vector<8x128xf32> to vector<8x32xf32>
    %48 = vector.extract_strided_slice %45 {offsets = [0, 64], sizes = [8, 32], strides = [1, 1]} : vector<8x128xf32> to vector<8x32xf32>
    %49 = vector.extract_strided_slice %44 {offsets = [0, 96], sizes = [8, 32], strides = [1, 1]} : vector<8x128xf32> to vector<8x32xf32>
    %50 = arith.mulf %47, %31 : vector<8x32xf32>
    %51 = arith.mulf %46, %48 : vector<8x32xf32>
    %52 = arith.addf %50, %51 : vector<8x32xf32>
    %53 = math.tanh %52 : vector<8x32xf32>
    %54 = arith.mulf %49, %53 : vector<8x32xf32>
    %c1 = arith.constant 1 : index
    %c0_19 = arith.constant 0 : index
    %c0_20 = arith.constant 0 : index
    %55 = vector.load %arg5[%c1, %c0_19, %c0_20] : memref<8x8x32xf32, #tpu.memory_space<vmem>>, vector<1x8x32xf32>
    %56 = vector.shape_cast %55 : vector<1x8x32xf32> to vector<8x32xf32>
    %57 = vector.shape_cast %54 : vector<8x32xf32> to vector<1x8x32xf32>
    tpu.vector_store %arg5[%c1, %c0_19, %c0_20], %57 {strides = array<i32>} : memref<8x8x32xf32, #tpu.memory_space<vmem>>, vector<1x8x32xf32>,
    %58 = vector.extract_strided_slice %12 {offsets = [16, 0], sizes = [8, 128], strides = [1, 1]} : vector<64x128xf32> to vector<8x128xf32>
    %cst_21 = arith.constant dense<0.000000e+00> : vector<8x128xf32>
    %59 = tpu.matmul %54, %13, %cst_21 {dimension_numbers = #tpu.dot_dimension_numbers<[1], [0], [0], [1], [0, 0, 1, 1], [], []>} : vector<8x32xf32>, vector<32x128xf32>, vector<8x128xf32> -> vector<8x128xf32>
    %60 = arith.addf %58, %59 : vector<8x128xf32>
    %61 = arith.negf %60 : vector<8x128xf32>
    %62 = math.exp %61 : vector<8x128xf32>
    %cst_22 = arith.constant 1.000000e+00 : f32
    %63 = vector.broadcast %cst_22 : f32 to vector<8x128xf32>
    %64 = arith.addf %63, %62 : vector<8x128xf32>
    %65 = arith.divf %63, %64 : vector<8x128xf32>
    %66 = math.tanh %60 : vector<8x128xf32>
    %67 = vector.extract_strided_slice %65 {offsets = [0, 0], sizes = [8, 32], strides = [1, 1]} : vector<8x128xf32> to vector<8x32xf32>
    %68 = vector.extract_strided_slice %65 {offsets = [0, 32], sizes = [8, 32], strides = [1, 1]} : vector<8x128xf32> to vector<8x32xf32>
    %69 = vector.extract_strided_slice %66 {offsets = [0, 64], sizes = [8, 32], strides = [1, 1]} : vector<8x128xf32> to vector<8x32xf32>
    %70 = vector.extract_strided_slice %65 {offsets = [0, 96], sizes = [8, 32], strides = [1, 1]} : vector<8x128xf32> to vector<8x32xf32>
    %71 = arith.mulf %68, %52 : vector<8x32xf32>
    %72 = arith.mulf %67, %69 : vector<8x32xf32>
    %73 = arith.addf %71, %72 : vector<8x32xf32>
    %74 = math.tanh %73 : vector<8x32xf32>
    %75 = arith.mulf %70, %74 : vector<8x32xf32>
    %c2 = arith.constant 2 : index
    %c0_23 = arith.constant 0 : index
    %c0_24 = arith.constant 0 : index
    %76 = vector.load %arg5[%c2, %c0_23, %c0_24] : memref<8x8x32xf32, #tpu.memory_space<vmem>>, vector<1x8x32xf32>
    %77 = vector.shape_cast %76 : vector<1x8x32xf32> to vector<8x32xf32>
    %78 = vector.shape_cast %75 : vector<8x32xf32> to vector<1x8x32xf32>
    tpu.vector_store %arg5[%c2, %c0_23, %c0_24], %78 {strides = array<i32>} : memref<8x8x32xf32, #tpu.memory_space<vmem>>, vector<1x8x32xf32>,
    %79 = vector.extract_strided_slice %12 {offsets = [24, 0], sizes = [8, 128], strides = [1, 1]} : vector<64x128xf32> to vector<8x128xf32>
    %cst_25 = arith.constant dense<0.000000e+00> : vector<8x128xf32>
    %80 = tpu.matmul %75, %13, %cst_25 {dimension_numbers = #tpu.dot_dimension_numbers<[1], [0], [0], [1], [0, 0, 1, 1], [], []>} : vector<8x32xf32>, vector<32x128xf32>, vector<8x128xf32> -> vector<8x128xf32>
    %81 = arith.addf %79, %80 : vector<8x128xf32>
    %82 = arith.negf %81 : vector<8x128xf32>
    %83 = math.exp %82 : vector<8x128xf32>
    %cst_26 = arith.constant 1.000000e+00 : f32
    %84 = vector.broadcast %cst_26 : f32 to vector<8x128xf32>
    %85 = arith.addf %84, %83 : vector<8x128xf32>
    %86 = arith.divf %84, %85 : vector<8x128xf32>
    %87 = math.tanh %81 : vector<8x128xf32>
    %88 = vector.extract_strided_slice %86 {offsets = [0, 0], sizes = [8, 32], strides = [1, 1]} : vector<8x128xf32> to vector<8x32xf32>
    %89 = vector.extract_strided_slice %86 {offsets = [0, 32], sizes = [8, 32], strides = [1, 1]} : vector<8x128xf32> to vector<8x32xf32>
    %90 = vector.extract_strided_slice %87 {offsets = [0, 64], sizes = [8, 32], strides = [1, 1]} : vector<8x128xf32> to vector<8x32xf32>
    %91 = vector.extract_strided_slice %86 {offsets = [0, 96], sizes = [8, 32], strides = [1, 1]} : vector<8x128xf32> to vector<8x32xf32>
    %92 = arith.mulf %89, %73 : vector<8x32xf32>
    %93 = arith.mulf %88, %90 : vector<8x32xf32>
    %94 = arith.addf %92, %93 : vector<8x32xf32>
    %95 = math.tanh %94 : vector<8x32xf32>
    %96 = arith.mulf %91, %95 : vector<8x32xf32>
    %c3 = arith.constant 3 : index
    %c0_27 = arith.constant 0 : index
    %c0_28 = arith.constant 0 : index
    %97 = vector.load %arg5[%c3, %c0_27, %c0_28] : memref<8x8x32xf32, #tpu.memory_space<vmem>>, vector<1x8x32xf32>
    %98 = vector.shape_cast %97 : vector<1x8x32xf32> to vector<8x32xf32>
    %99 = vector.shape_cast %96 : vector<8x32xf32> to vector<1x8x32xf32>
    tpu.vector_store %arg5[%c3, %c0_27, %c0_28], %99 {strides = array<i32>} : memref<8x8x32xf32, #tpu.memory_space<vmem>>, vector<1x8x32xf32>,
    %100 = vector.extract_strided_slice %12 {offsets = [32, 0], sizes = [8, 128], strides = [1, 1]} : vector<64x128xf32> to vector<8x128xf32>
    %cst_29 = arith.constant dense<0.000000e+00> : vector<8x128xf32>
    %101 = tpu.matmul %96, %13, %cst_29 {dimension_numbers = #tpu.dot_dimension_numbers<[1], [0], [0], [1], [0, 0, 1, 1], [], []>} : vector<8x32xf32>, vector<32x128xf32>, vector<8x128xf32> -> vector<8x128xf32>
    %102 = arith.addf %100, %101 : vector<8x128xf32>
    %103 = arith.negf %102 : vector<8x128xf32>
    %104 = math.exp %103 : vector<8x128xf32>
    %cst_30 = arith.constant 1.000000e+00 : f32
    %105 = vector.broadcast %cst_30 : f32 to vector<8x128xf32>
    %106 = arith.addf %105, %104 : vector<8x128xf32>
    %107 = arith.divf %105, %106 : vector<8x128xf32>
    %108 = math.tanh %102 : vector<8x128xf32>
    %109 = vector.extract_strided_slice %107 {offsets = [0, 0], sizes = [8, 32], strides = [1, 1]} : vector<8x128xf32> to vector<8x32xf32>
    %110 = vector.extract_strided_slice %107 {offsets = [0, 32], sizes = [8, 32], strides = [1, 1]} : vector<8x128xf32> to vector<8x32xf32>
    %111 = vector.extract_strided_slice %108 {offsets = [0, 64], sizes = [8, 32], strides = [1, 1]} : vector<8x128xf32> to vector<8x32xf32>
    %112 = vector.extract_strided_slice %107 {offsets = [0, 96], sizes = [8, 32], strides = [1, 1]} : vector<8x128xf32> to vector<8x32xf32>
    %113 = arith.mulf %110, %94 : vector<8x32xf32>
    %114 = arith.mulf %109, %111 : vector<8x32xf32>
    %115 = arith.addf %113, %114 : vector<8x32xf32>
    %116 = math.tanh %115 : vector<8x32xf32>
    %117 = arith.mulf %112, %116 : vector<8x32xf32>
    %c4 = arith.constant 4 : index
    %c0_31 = arith.constant 0 : index
    %c0_32 = arith.constant 0 : index
    %118 = vector.load %arg5[%c4, %c0_31, %c0_32] : memref<8x8x32xf32, #tpu.memory_space<vmem>>, vector<1x8x32xf32>
    %119 = vector.shape_cast %118 : vector<1x8x32xf32> to vector<8x32xf32>
    %120 = vector.shape_cast %117 : vector<8x32xf32> to vector<1x8x32xf32>
    tpu.vector_store %arg5[%c4, %c0_31, %c0_32], %120 {strides = array<i32>} : memref<8x8x32xf32, #tpu.memory_space<vmem>>, vector<1x8x32xf32>,
    %121 = vector.extract_strided_slice %12 {offsets = [40, 0], sizes = [8, 128], strides = [1, 1]} : vector<64x128xf32> to vector<8x128xf32>
    %cst_33 = arith.constant dense<0.000000e+00> : vector<8x128xf32>
    %122 = tpu.matmul %117, %13, %cst_33 {dimension_numbers = #tpu.dot_dimension_numbers<[1], [0], [0], [1], [0, 0, 1, 1], [], []>} : vector<8x32xf32>, vector<32x128xf32>, vector<8x128xf32> -> vector<8x128xf32>
    %123 = arith.addf %121, %122 : vector<8x128xf32>
    %124 = arith.negf %123 : vector<8x128xf32>
    %125 = math.exp %124 : vector<8x128xf32>
    %cst_34 = arith.constant 1.000000e+00 : f32
    %126 = vector.broadcast %cst_34 : f32 to vector<8x128xf32>
    %127 = arith.addf %126, %125 : vector<8x128xf32>
    %128 = arith.divf %126, %127 : vector<8x128xf32>
    %129 = math.tanh %123 : vector<8x128xf32>
    %130 = vector.extract_strided_slice %128 {offsets = [0, 0], sizes = [8, 32], strides = [1, 1]} : vector<8x128xf32> to vector<8x32xf32>
    %131 = vector.extract_strided_slice %128 {offsets = [0, 32], sizes = [8, 32], strides = [1, 1]} : vector<8x128xf32> to vector<8x32xf32>
    %132 = vector.extract_strided_slice %129 {offsets = [0, 64], sizes = [8, 32], strides = [1, 1]} : vector<8x128xf32> to vector<8x32xf32>
    %133 = vector.extract_strided_slice %128 {offsets = [0, 96], sizes = [8, 32], strides = [1, 1]} : vector<8x128xf32> to vector<8x32xf32>
    %134 = arith.mulf %131, %115 : vector<8x32xf32>
    %135 = arith.mulf %130, %132 : vector<8x32xf32>
    %136 = arith.addf %134, %135 : vector<8x32xf32>
    %137 = math.tanh %136 : vector<8x32xf32>
    %138 = arith.mulf %133, %137 : vector<8x32xf32>
    %c5 = arith.constant 5 : index
    %c0_35 = arith.constant 0 : index
    %c0_36 = arith.constant 0 : index
    %139 = vector.load %arg5[%c5, %c0_35, %c0_36] : memref<8x8x32xf32, #tpu.memory_space<vmem>>, vector<1x8x32xf32>
    %140 = vector.shape_cast %139 : vector<1x8x32xf32> to vector<8x32xf32>
    %141 = vector.shape_cast %138 : vector<8x32xf32> to vector<1x8x32xf32>
    tpu.vector_store %arg5[%c5, %c0_35, %c0_36], %141 {strides = array<i32>} : memref<8x8x32xf32, #tpu.memory_space<vmem>>, vector<1x8x32xf32>,
    %142 = vector.extract_strided_slice %12 {offsets = [48, 0], sizes = [8, 128], strides = [1, 1]} : vector<64x128xf32> to vector<8x128xf32>
    %cst_37 = arith.constant dense<0.000000e+00> : vector<8x128xf32>
    %143 = tpu.matmul %138, %13, %cst_37 {dimension_numbers = #tpu.dot_dimension_numbers<[1], [0], [0], [1], [0, 0, 1, 1], [], []>} : vector<8x32xf32>, vector<32x128xf32>, vector<8x128xf32> -> vector<8x128xf32>
    %144 = arith.addf %142, %143 : vector<8x128xf32>
    %145 = arith.negf %144 : vector<8x128xf32>
    %146 = math.exp %145 : vector<8x128xf32>
    %cst_38 = arith.constant 1.000000e+00 : f32
    %147 = vector.broadcast %cst_38 : f32 to vector<8x128xf32>
    %148 = arith.addf %147, %146 : vector<8x128xf32>
    %149 = arith.divf %147, %148 : vector<8x128xf32>
    %150 = math.tanh %144 : vector<8x128xf32>
    %151 = vector.extract_strided_slice %149 {offsets = [0, 0], sizes = [8, 32], strides = [1, 1]} : vector<8x128xf32> to vector<8x32xf32>
    %152 = vector.extract_strided_slice %149 {offsets = [0, 32], sizes = [8, 32], strides = [1, 1]} : vector<8x128xf32> to vector<8x32xf32>
    %153 = vector.extract_strided_slice %150 {offsets = [0, 64], sizes = [8, 32], strides = [1, 1]} : vector<8x128xf32> to vector<8x32xf32>
    %154 = vector.extract_strided_slice %149 {offsets = [0, 96], sizes = [8, 32], strides = [1, 1]} : vector<8x128xf32> to vector<8x32xf32>
    %155 = arith.mulf %152, %136 : vector<8x32xf32>
    %156 = arith.mulf %151, %153 : vector<8x32xf32>
    %157 = arith.addf %155, %156 : vector<8x32xf32>
    %158 = math.tanh %157 : vector<8x32xf32>
    %159 = arith.mulf %154, %158 : vector<8x32xf32>
    %c6 = arith.constant 6 : index
    %c0_39 = arith.constant 0 : index
    %c0_40 = arith.constant 0 : index
    %160 = vector.load %arg5[%c6, %c0_39, %c0_40] : memref<8x8x32xf32, #tpu.memory_space<vmem>>, vector<1x8x32xf32>
    %161 = vector.shape_cast %160 : vector<1x8x32xf32> to vector<8x32xf32>
    %162 = vector.shape_cast %159 : vector<8x32xf32> to vector<1x8x32xf32>
    tpu.vector_store %arg5[%c6, %c0_39, %c0_40], %162 {strides = array<i32>} : memref<8x8x32xf32, #tpu.memory_space<vmem>>, vector<1x8x32xf32>,
    %163 = vector.extract_strided_slice %12 {offsets = [56, 0], sizes = [8, 128], strides = [1, 1]} : vector<64x128xf32> to vector<8x128xf32>
    %cst_41 = arith.constant dense<0.000000e+00> : vector<8x128xf32>
    %164 = tpu.matmul %159, %13, %cst_41 {dimension_numbers = #tpu.dot_dimension_numbers<[1], [0], [0], [1], [0, 0, 1, 1], [], []>} : vector<8x32xf32>, vector<32x128xf32>, vector<8x128xf32> -> vector<8x128xf32>
    %165 = arith.addf %163, %164 : vector<8x128xf32>
    %166 = arith.negf %165 : vector<8x128xf32>
    %167 = math.exp %166 : vector<8x128xf32>
    %cst_42 = arith.constant 1.000000e+00 : f32
    %168 = vector.broadcast %cst_42 : f32 to vector<8x128xf32>
    %169 = arith.addf %168, %167 : vector<8x128xf32>
    %170 = arith.divf %168, %169 : vector<8x128xf32>
    %171 = math.tanh %165 : vector<8x128xf32>
    %172 = vector.extract_strided_slice %170 {offsets = [0, 0], sizes = [8, 32], strides = [1, 1]} : vector<8x128xf32> to vector<8x32xf32>
    %173 = vector.extract_strided_slice %170 {offsets = [0, 32], sizes = [8, 32], strides = [1, 1]} : vector<8x128xf32> to vector<8x32xf32>
    %174 = vector.extract_strided_slice %171 {offsets = [0, 64], sizes = [8, 32], strides = [1, 1]} : vector<8x128xf32> to vector<8x32xf32>
    %175 = vector.extract_strided_slice %170 {offsets = [0, 96], sizes = [8, 32], strides = [1, 1]} : vector<8x128xf32> to vector<8x32xf32>
    %176 = arith.mulf %173, %157 : vector<8x32xf32>
    %177 = arith.mulf %172, %174 : vector<8x32xf32>
    %178 = arith.addf %176, %177 : vector<8x32xf32>
    %179 = math.tanh %178 : vector<8x32xf32>
    %180 = arith.mulf %175, %179 : vector<8x32xf32>
    %c7 = arith.constant 7 : index
    %c0_43 = arith.constant 0 : index
    %c0_44 = arith.constant 0 : index
    %181 = vector.load %arg5[%c7, %c0_43, %c0_44] : memref<8x8x32xf32, #tpu.memory_space<vmem>>, vector<1x8x32xf32>
    %182 = vector.shape_cast %181 : vector<1x8x32xf32> to vector<8x32xf32>
    %183 = vector.shape_cast %180 : vector<8x32xf32> to vector<1x8x32xf32>
    tpu.vector_store %arg5[%c7, %c0_43, %c0_44], %183 {strides = array<i32>} : memref<8x8x32xf32, #tpu.memory_space<vmem>>, vector<1x8x32xf32>,
    %c0_45 = arith.constant 0 : index
    %c0_46 = arith.constant 0 : index
    %184 = vector.load %arg6[%c0_45, %c0_46] : memref<8x32xf32, #tpu.memory_space<vmem>>, vector<8x32xf32>
    tpu.vector_store %arg6[%c0_45, %c0_46], %178 {strides = array<i32>} : memref<8x32xf32, #tpu.memory_space<vmem>>, vector<8x32xf32>,
    return
  }
}

</mosaic_0001>

<llo_original>
// kernel: squeeze.0
$region0: #{squeeze.0}
  %s0 = inlined_call_operand.vmem [shape: s32[8,8], index: 0, kind: input, shape index: {}]
  %s1 = inlined_call_operand.vmem [shape: s32[64,1], index: 1, kind: output, shape index: {}]
  %v2 = vld [vmem:[%s0] sm:$0xff]
  %vm3 = vcmask 7168
  %4 = vst.msk [vmem:[%s1] ss:$8 sm:$0xf] %vm3, %v2
  %5 = vst.msk [vmem:[%s1] ss:$8 sm:$0xf0] %vm3, %v2
  %v6 = vld [vmem:[%s0] sm:$0xff]
  %7 = vrot.lane.b32.xlu0 %v6, 127
  %v8 = vpop.permute.xlu0 %7
  %vm9 = vcmask 7168
  %s10 = scalar_lea.vmem %s1, 1
  %11 = vst.msk [vmem:[%s10] ss:$8 sm:$0xf] %vm9, %v8
  %s12 = scalar_lea.vmem %s1, 1
  %13 = vst.msk [vmem:[%s12] ss:$8 sm:$0xf0] %vm9, %v8
  %v14 = vld [vmem:[%s0] sm:$0xff]
  %15 = vrot.lane.b32.xlu0 %v14, 126
  %v16 = vpop.permute.xlu0 %15
  %vm17 = vcmask 7168
  %s18 = scalar_lea.vmem %s1, 2
  %19 = vst.msk [vmem:[%s18] ss:$8 sm:$0xf] %vm17, %v16
  %s20 = scalar_lea.vmem %s1, 2
  %21 = vst.msk [vmem:[%s20] ss:$8 sm:$0xf0] %vm17, %v16
  %v22 = vld [vmem:[%s0] sm:$0xff]
  %23 = vrot.lane.b32.xlu0 %v22, 125
  %v24 = vpop.permute.xlu0 %23
  %vm25 = vcmask 7168
  %s26 = scalar_lea.vmem %s1, 3
  %27 = vst.msk [vmem:[%s26] ss:$8 sm:$0xf] %vm25, %v24
  %s28 = scalar_lea.vmem %s1, 3
  %29 = vst.msk [vmem:[%s28] ss:$8 sm:$0xf0] %vm25, %v24
  %v30 = vld [vmem:[%s0] sm:$0xff]
  %31 = vrot.lane.b32.xlu0 %v30, 124
  %v32 = vpop.permute.xlu0 %31
  %vm33 = vcmask 7168
  %s34 = scalar_lea.vmem %s1, 4
  %35 = vst.msk [vmem:[%s34] ss:$8 sm:$0xf] %vm33, %v32
  %s36 = scalar_lea.vmem %s1, 4
  %37 = vst.msk [vmem:[%s36] ss:$8 sm:$0xf0] %vm33, %v32
  %v38 = vld [vmem:[%s0] sm:$0xff]
  %39 = vrot.lane.b32.xlu0 %v38, 123
  %v40 = vpop.permute.xlu0 %39
  %vm41 = vcmask 7168
  %s42 = scalar_lea.vmem %s1, 5
  %43 = vst.msk [vmem:[%s42] ss:$8 sm:$0xf] %vm41, %v40
  %s44 = scalar_lea.vmem %s1, 5
  %45 = vst.msk [vmem:[%s44] ss:$8 sm:$0xf0] %vm41, %v40
  %v46 = vld [vmem:[%s0] sm:$0xff]
  %47 = vrot.lane.b32.xlu0 %v46, 122
  %v48 = vpop.permute.xlu0 %47
  %vm49 = vcmask 7168
  %s50 = scalar_lea.vmem %s1, 6
  %51 = vst.msk [vmem:[%s50] ss:$8 sm:$0xf] %vm49, %v48
  %s52 = scalar_lea.vmem %s1, 6
  %53 = vst.msk [vmem:[%s52] ss:$8 sm:$0xf0] %vm49, %v48
  %v54 = vld [vmem:[%s0] sm:$0xff]
  %55 = vrot.lane.b32.xlu0 %v54, 121
  %v56 = vpop.permute.xlu0 %55
  %vm57 = vcmask 7168
  %s58 = scalar_lea.vmem %s1, 7
  %59 = vst.msk [vmem:[%s58] ss:$8 sm:$0xf] %vm57, %v56
  %s60 = scalar_lea.vmem %s1, 7
  %61 = vst.msk [vmem:[%s60] ss:$8 sm:$0xf0] %vm57, %v56

// kernel: encoder_forward.1
$region0: #{encoder_forward.1}
  #allocation0 [shape = 'u32[]', space=smem, size = 0x4, offset = 0x4, fixed_abs, tag = 'smem constant byte address 0x4 - core index']
  #allocation1 [shape = 'u32[144,128]{1,0:T(1,128)}', space=vmem, size = 0x12000, scoped, tag = 'internal scratch']
  %s0 = inlined_call_operand.vmem [shape: s32[64,1], index: 0, kind: input, shape index: {}]
  %s1 = inlined_call_operand.vmem [shape: f32[128,32], index: 1, kind: input, shape index: {}]
  %s2 = inlined_call_operand.vmem [shape: f32[32,128], index: 2, kind: input, shape index: {}]
  %s3 = inlined_call_operand.vmem [shape: f32[1,128], index: 3, kind: input, shape index: {}]
  %s4 = inlined_call_operand.vmem [shape: f32[32,128], index: 4, kind: input, shape index: {}]
  %s5 = inlined_call_operand.vmem [shape: f32[8,8,32], index: 5, kind: output, shape index: {0}]
  %s6 = inlined_call_operand.hbm [shape: f32[8,32], index: 6, kind: output, shape index: {1}]
  %7 = xla_tuple %s5, %s6
  %s8 = sld [smem:[#allocation0]]
  $region38: #{encoder_forward.1} parent=0
    _
  %s10 = ssub.s32 1, %s8
  %s11 = scalar_select 0, %s10, %s8
  $region1: #{encoder_forward.1} parent=0
    #allocation2 [shape = 'u8[4096]{0}', space=vmem, size = 0x1000, scoped, tag = 'output window, operand 1, single buffered']
    #allocation3 [shape = 's32[1]{0}', space=sflag, size = 0x4, scoped, tag = 'scoped memory for encoder_forward.1']
    %12 = vsyncpa [#allocation3], 0
    // Predicated region
    $region2: #{encoder_forward.1} parent=1 // pred_check
      _
    $region3: #{encoder_forward.1} parent=1 // pred_check_branch
      %14 = sbr.rel (0) target = $region5
    $region4: #{encoder_forward.1} parent=1 // pred_region
      _
    $region5: #{encoder_forward.1} parent=1 // pred_fallthru
      _
    // Predicated region
    $region6: #{encoder_forward.1} parent=1 // pred_check
      _
    $region7: #{encoder_forward.1} parent=1 // pred_check_branch
      %16 = sbr.rel (0) target = $region9
    $region8: #{encoder_forward.1} parent=1 // pred_region
      _
    $region9: #{encoder_forward.1} parent=1 // pred_fallthru
      _
    // Predicated region
    $region10: #{encoder_forward.1} parent=1 // pred_check
      _
    $region11: #{encoder_forward.1} parent=1 // pred_check_branch
      %18 = sbr.rel (0) target = $region13
    $region12: #{encoder_forward.1} parent=1 // pred_region
      _
    $region13: #{encoder_forward.1} parent=1 // pred_fallthru
      _
    // Predicated region
    $region14: #{encoder_forward.1} parent=1 // pred_check
      _
    $region15: #{encoder_forward.1} parent=1 // pred_check_branch
      %20 = sbr.rel (0) target = $region17
    $region16: #{encoder_forward.1} parent=1 // pred_region
      _
    $region17: #{encoder_forward.1} parent=1 // pred_fallthru
      _
    // Predicated region
    $region18: #{encoder_forward.1} parent=1 // pred_check
      _
    $region19: #{encoder_forward.1} parent=1 // pred_check_branch
      %22 = sbr.rel (0) target = $region21
    $region20: #{encoder_forward.1} parent=1 // pred_region
      _
    $region21: #{encoder_forward.1} parent=1 // pred_fallthru
      _
    %v23 = vld [vmem:[%s1] sm:$0xff]
    %v24 = vld [vmem:[%s1 + $0x8] sm:$0xff]
    %v25 = vld [vmem:[%s1 + $0x10] sm:$0xff]
    %v26 = vld [vmem:[%s1 + $0x18] sm:$0xff]
    %v27 = vld [vmem:[%s1 + $0x20] sm:$0xff]
    %v28 = vld [vmem:[%s1 + $0x28] sm:$0xff]
    %v29 = vld [vmem:[%s1 + $0x30] sm:$0xff]
    %v30 = vld [vmem:[%s1 + $0x38] sm:$0xff]
    %v31 = vld [vmem:[%s1 + $0x40] sm:$0xff]
    %v32 = vld [vmem:[%s1 + $0x48] sm:$0xff]
    %v33 = vld [vmem:[%s1 + $0x50] sm:$0xff]
    %v34 = vld [vmem:[%s1 + $0x58] sm:$0xff]
    %v35 = vld [vmem:[%s1 + $0x60] sm:$0xff]
    %v36 = vld [vmem:[%s1 + $0x68] sm:$0xff]
    %v37 = vld [vmem:[%s1 + $0x70] sm:$0xff]
    %v38 = vld [vmem:[%s1 + $0x78] sm:$0xff]
    %v39 = vld [vmem:[%s2] sm:$0xff]
    %v40 = vld [vmem:[%s2 + $0x8] sm:$0xff]
    %v41 = vld [vmem:[%s2 + $0x10] sm:$0xff]
    %v42 = vld [vmem:[%s2 + $0x18] sm:$0xff]
    %v43 = vld [vmem:[%s3] sm:$0x1]
    %v45 = vlaneseq
    %v46 = vshrl.u32 %v45, 7
    %v47 = vsub.s32 0, %v46
    %v48 = vrot.slane %v43, %v47
    %vm50 = vcmask 261120
    %v52 = vsel %vm50, %v23, 0
    %v55 = vsel %vm50, %v24, 0
    %v58 = vsel %vm50, %v25, 0
    %v61 = vsel %vm50, %v26, 0
    %v64 = vsel %vm50, %v27, 0
    %v67 = vsel %vm50, %v28, 0
    %v70 = vsel %vm50, %v29, 0
    %v73 = vsel %vm50, %v30, 0
    %v76 = vsel %vm50, %v31, 0
    %v79 = vsel %vm50, %v32, 0
    %v82 = vsel %vm50, %v33, 0
    %v85 = vsel %vm50, %v34, 0
    %v88 = vsel %vm50, %v35, 0
    %v91 = vsel %vm50, %v36, 0
    %v94 = vsel %vm50, %v37, 0
    %v97 = vsel %vm50, %v38, 0
    %99 = vmatprep.subr.mxu0 0.0
    %100 = vmatpush1.msra.mxu0 %v39
    %101 = vmatprep.subr.mxu0 0.0
    %102 = vmatpush1.msra.mxu0 %v40
    %103 = vmatprep.subr.mxu0 0.0
    %104 = vmatpush1.msra.mxu0 %v41
    %105 = vmatprep.subr.mxu0 0.0
    %106 = vmatpush1.msra.mxu0 %v42
    %107 = vmatprep.subr.mxu0 0.0
    %108 = vmatpush1.msra.mxu0 0.0
    %109 = vmatprep.subr.mxu0 0.0
    %110 = vmatpush1.msra.mxu0 0.0
    %111 = vmatprep.subr.mxu0 0.0
    %112 = vmatpush1.msra.mxu0 0.0
    %113 = vmatprep.subr.mxu0 0.0
    %114 = vmatpush1.msra.mxu0 0.0
    %115 = vmatprep.subr.mxu0 0.0
    %116 = vmatpush1.msra.mxu0 0.0
    %117 = vmatprep.subr.mxu0 0.0
    %118 = vmatpush1.msra.mxu0 0.0
    %119 = vmatprep.subr.mxu0 0.0
    %120 = vmatpush1.msra.mxu0 0.0
    %121 = vmatprep.subr.mxu0 0.0
    %122 = vmatpush1.msra.mxu0 0.0
    %123 = vmatprep.subr.mxu0 0.0
    %124 = vmatpush1.msra.mxu0 0.0
    %125 = vmatprep.subr.mxu0 0.0
    %126 = vmatpush1.msra.mxu0 0.0
    %127 = vmatprep.subr.mxu0 0.0
    %128 = vmatpush1.msra.mxu0 0.0
    %129 = vmatprep.subr.mxu0 0.0
    %130 = vmatpush1.msra.mxu0 0.0
    %131 = vmatprep.subr.mxu0 0.0
    %132 = vmatpush1.msra.mxu0 0.0
    %133 = vmatprep.subr.mxu0 0.0
    %134 = vmatpush1.msra.mxu0 0.0
    %135 = vmatprep.subr.mxu0 0.0
    %136 = vmatpush1.msra.mxu0 0.0
    %137 = vmatprep.subr.mxu0 0.0
    %138 = vmatpush1.msra.mxu0 0.0
    %139 = vmatprep.subr.mxu0 0.0
    %140 = vmatpush1.msra.mxu0 0.0
    %141 = vmatprep.subr.mxu0 0.0
    %142 = vmatpush1.msra.mxu0 0.0
    %143 = vmatprep.subr.mxu0 0.0
    %144 = vmatpush1.msra.mxu0 0.0
    %145 = vmatprep.subr.mxu0 0.0
    %146 = vmatpush1.msra.mxu0 0.0
    %147 = vmatprep.subr.mxu0 0.0
    %148 = vmatpush1.msra.mxu0 0.0
    %149 = vmatprep.subr.mxu0 0.0
    %150 = vmatpush1.msra.mxu0 0.0
    %151 = vmatprep.subr.mxu0 0.0
    %152 = vmatpush1.msra.mxu0 0.0
    %153 = vmatprep.subr.mxu0 0.0
    %154 = vmatpush1.msra.mxu0 0.0
    %155 = vmatprep.subr.mxu0 0.0
    %156 = vmatpush1.msra.mxu0 0.0
    %157 = vmatprep.subr.mxu0 0.0
    %158 = vmatpush1.msra.mxu0 0.0
    %159 = vmatprep.subr.mxu0 0.0
    %160 = vmatpush1.msra.mxu0 0.0
    %161 = vmatprep.subr.mxu0 0.0
    %162 = vmatpush1.msra.mxu0 0.0
    %163 = vmatprep.mubr.f32.mxu0 0.0
    %164 = vmatmul.mubr.f32.gmra.mrb[0].mxu0 %v52
    %v165 = vpop.f32.mrb[0].mxu0
    %v166 = vadd.f32 %v48, %v165
    %v167 = vpop.f32.mrb[0].mxu0
    %168 = vmatprep.mubr.f32.mxu0 0.0
    %169 = vmatmul.mubr.f32.gmra.mrb[0].mxu0 %v55
    %v170 = vpop.f32.mrb[0].mxu0
    %v171 = vadd.f32 %v48, %v170
    %v172 = vpop.f32.mrb[0].mxu0
    %173 = vmatprep.mubr.f32.mxu0 0.0
    %174 = vmatmul.mubr.f32.gmra.mrb[0].mxu0 %v58
    %v175 = vpop.f32.mrb[0].mxu0
    %v176 = vadd.f32 %v48, %v175
    %v177 = vpop.f32.mrb[0].mxu0
    %178 = vmatprep.mubr.f32.mxu0 0.0
    %179 = vmatmul.mubr.f32.gmra.mrb[0].mxu0 %v61
    %v180 = vpop.f32.mrb[0].mxu0
    %v181 = vadd.f32 %v48, %v180
    %v182 = vpop.f32.mrb[0].mxu0
    %183 = vmatprep.mubr.f32.mxu0 0.0
    %184 = vmatmul.mubr.f32.gmra.mrb[0].mxu0 %v64
    %v185 = vpop.f32.mrb[0].mxu0
    %v186 = vadd.f32 %v48, %v185
    %v187 = vpop.f32.mrb[0].mxu0
    %188 = vmatprep.mubr.f32.mxu0 0.0
    %189 = vmatmul.mubr.f32.gmra.mrb[0].mxu0 %v67
    %v190 = vpop.f32.mrb[0].mxu0
    %v191 = vadd.f32 %v48, %v190
    %v192 = vpop.f32.mrb[0].mxu0
    %193 = vmatprep.mubr.f32.mxu0 0.0
    %194 = vmatmul.mubr.f32.gmra.mrb[0].mxu0 %v70
    %v195 = vpop.f32.mrb[0].mxu0
    %v196 = vadd.f32 %v48, %v195
    %v197 = vpop.f32.mrb[0].mxu0
    %198 = vmatprep.mubr.f32.mxu0 0.0
    %199 = vmatmul.mubr.f32.gmra.mrb[0].mxu0 %v73
    %v200 = vpop.f32.mrb[0].mxu0
    %v201 = vadd.f32 %v48, %v200
    %v202 = vpop.f32.mrb[0].mxu0
    %203 = vmatprep.mubr.f32.mxu0 0.0
    %204 = vmatmul.mubr.f32.gmra.mrb[0].mxu0 %v76
    %v205 = vpop.f32.mrb[0].mxu0
    %v206 = vadd.f32 %v48, %v205
    %v207 = vpop.f32.mrb[0].mxu0
    %208 = vmatprep.mubr.f32.mxu0 0.0
    %209 = vmatmul.mubr.f32.gmra.mrb[0].mxu0 %v79
    %v210 = vpop.f32.mrb[0].mxu0
    %v211 = vadd.f32 %v48, %v210
    %v212 = vpop.f32.mrb[0].mxu0
    %213 = vmatprep.mubr.f32.mxu0 0.0
    %214 = vmatmul.mubr.f32.gmra.mrb[0].mxu0 %v82
    %v215 = vpop.f32.mrb[0].mxu0
    %v216 = vadd.f32 %v48, %v215
    %v217 = vpop.f32.mrb[0].mxu0
    %218 = vmatprep.mubr.f32.mxu0 0.0
    %219 = vmatmul.mubr.f32.gmra.mrb[0].mxu0 %v85
    %v220 = vpop.f32.mrb[0].mxu0
    %v221 = vadd.f32 %v48, %v220
    %v222 = vpop.f32.mrb[0].mxu0
    %223 = vmatprep.mubr.f32.mxu0 0.0
    %224 = vmatmul.mubr.f32.gmra.mrb[0].mxu0 %v88
    %v225 = vpop.f32.mrb[0].mxu0
    %v226 = vadd.f32 %v48, %v225
    %v227 = vpop.f32.mrb[0].mxu0
    %228 = vmatprep.mubr.f32.mxu0 0.0
    %229 = vmatmul.mubr.f32.gmra.mrb[0].mxu0 %v91
    %v230 = vpop.f32.mrb[0].mxu0
    %v231 = vadd.f32 %v48, %v230
    %v232 = vpop.f32.mrb[0].mxu0
    %233 = vmatprep.mubr.f32.mxu0 0.0
    %234 = vmatmul.mubr.f32.gmra.mrb[0].mxu0 %v94
    %v235 = vpop.f32.mrb[0].mxu0
    %v236 = vadd.f32 %v48, %v235
    %v237 = vpop.f32.mrb[0].mxu0
    %238 = vmatprep.mubr.f32.mxu0 0.0
    %239 = vmatmul.mubr.f32.gmra.mrb[0].mxu0 %v97
    %v240 = vpop.f32.mrb[0].mxu0
    %v241 = vadd.f32 %v48, %v240
    %v242 = vpop.f32.mrb[0].mxu0
    %243 = vdwg.mxu0
    %v244 = vld [vmem:[%s0] sm:$0xff]
    %v245 = vld [vmem:[%s0 + $0x8] sm:$0xff]
    %v246 = vld [vmem:[%s0 + $0x10] sm:$0xff]
    %v247 = vld [vmem:[%s0 + $0x18] sm:$0xff]
    %v248 = vld [vmem:[%s0 + $0x20] sm:$0xff]
    %v249 = vld [vmem:[%s0 + $0x28] sm:$0xff]
    %v250 = vld [vmem:[%s0 + $0x30] sm:$0xff]
    %v251 = vld [vmem:[%s0 + $0x38] sm:$0xff]
    %v252 = vlaneseq
    %v253 = vand.u32 %v252, 127
    %254 = vset.pattern.permute.xlu0 0
    %255 = vperm.xlu0 %254, %v244
    %v256 = vpop.permute.xlu0 %255
    %257 = vset.pattern.permute.xlu0 0
    %258 = vperm.xlu0 %257, %v245
    %v259 = vpop.permute.xlu0 %258
    %260 = vset.pattern.permute.xlu0 0
    %261 = vperm.xlu0 %260, %v246
    %v262 = vpop.permute.xlu0 %261
    %263 = vset.pattern.permute.xlu0 0
    %264 = vperm.xlu0 %263, %v247
    %v265 = vpop.permute.xlu0 %264
    %266 = vset.pattern.permute.xlu0 0
    %267 = vperm.xlu0 %266, %v248
    %v268 = vpop.permute.xlu0 %267
    %269 = vset.pattern.permute.xlu0 0
    %270 = vperm.xlu0 %269, %v249
    %v271 = vpop.permute.xlu0 %270
    %272 = vset.pattern.permute.xlu0 0
    %273 = vperm.xlu0 %272, %v250
    %v274 = vpop.permute.xlu0 %273
    %275 = vset.pattern.permute.xlu0 0
    %276 = vperm.xlu0 %275, %v251
    %v277 = vpop.permute.xlu0 %276
    %vm278 = vcmp.eq.s32.totalorder %v253, %v256
    %vm279 = vcmp.eq.s32.totalorder %v253, %v259
    %vm280 = vcmp.eq.s32.totalorder %v253, %v262
    %vm281 = vcmp.eq.s32.totalorder %v253, %v265
    %vm282 = vcmp.eq.s32.totalorder %v253, %v268
    %vm283 = vcmp.eq.s32.totalorder %v253, %v271
    %vm284 = vcmp.eq.s32.totalorder %v253, %v274
    %vm285 = vcmp.eq.s32.totalorder %v253, %v277
    %v286 = vsel %vm278, 1, 0
    %v287 = vsel %vm279, 1, 0
    %v288 = vsel %vm280, 1, 0
    %v289 = vsel %vm281, 1, 0
    %v290 = vsel %vm282, 1, 0
    %v291 = vsel %vm283, 1, 0
    %v292 = vsel %vm284, 1, 0
    %v293 = vsel %vm285, 1, 0
    %v294 = vcvt.s32.f32 %v286
    %v295 = vcvt.s32.f32 %v287
    %v296 = vcvt.s32.f32 %v288
    %v297 = vcvt.s32.f32 %v289
    %v298 = vcvt.s32.f32 %v290
    %v299 = vcvt.s32.f32 %v291
    %v300 = vcvt.s32.f32 %v292
    %v301 = vcvt.s32.f32 %v293
    %302 = vmatprep.subr.mxu0 0.0
    %303 = vmatpush1.msra.mxu0 %v166
    %304 = vmatprep.subr.mxu0 0.0
    %305 = vmatpush1.msra.mxu0 %v171
    %306 = vmatprep.subr.mxu0 0.0
    %307 = vmatpush1.msra.mxu0 %v176
    %308 = vmatprep.subr.mxu0 0.0
    %309 = vmatpush1.msra.mxu0 %v181
    %310 = vmatprep.subr.mxu0 0.0
    %311 = vmatpush1.msra.mxu0 %v186
    %312 = vmatprep.subr.mxu0 0.0
    %313 = vmatpush1.msra.mxu0 %v191
    %314 = vmatprep.subr.mxu0 0.0
    %315 = vmatpush1.msra.mxu0 %v196
    %316 = vmatprep.subr.mxu0 0.0
    %317 = vmatpush1.msra.mxu0 %v201
    %318 = vmatprep.subr.mxu0 0.0
    %319 = vmatpush1.msra.mxu0 %v206
    %320 = vmatprep.subr.mxu0 0.0
    %321 = vmatpush1.msra.mxu0 %v211
    %322 = vmatprep.subr.mxu0 0.0
    %323 = vmatpush1.msra.mxu0 %v216
    %324 = vmatprep.subr.mxu0 0.0
    %325 = vmatpush1.msra.mxu0 %v221
    %326 = vmatprep.subr.mxu0 0.0
    %327 = vmatpush1.msra.mxu0 %v226
    %328 = vmatprep.subr.mxu0 0.0
    %329 = vmatpush1.msra.mxu0 %v231
    %330 = vmatprep.subr.mxu0 0.0
    %331 = vmatpush1.msra.mxu0 %v236
    %332 = vmatprep.subr.mxu0 0.0
    %333 = vmatpush1.msra.mxu0 %v241
    %334 = vmatprep.subr.mxu0 0.0
    %335 = vmatpush1.msra.mxu0 0.0
    %336 = vmatprep.subr.mxu0 0.0
    %337 = vmatpush1.msra.mxu0 0.0
    %338 = vmatprep.subr.mxu0 0.0
    %339 = vmatpush1.msra.mxu0 0.0
    %340 = vmatprep.subr.mxu0 0.0
    %341 = vmatpush1.msra.mxu0 0.0
    %342 = vmatprep.subr.mxu0 0.0
    %343 = vmatpush1.msra.mxu0 0.0
    %344 = vmatprep.subr.mxu0 0.0
    %345 = vmatpush1.msra.mxu0 0.0
    %346 = vmatprep.subr.mxu0 0.0
    %347 = vmatpush1.msra.mxu0 0.0
    %348 = vmatprep.subr.mxu0 0.0
    %349 = vmatpush1.msra.mxu0 0.0
    %350 = vmatprep.subr.mxu0 0.0
    %351 = vmatpush1.msra.mxu0 0.0
    %352 = vmatprep.subr.mxu0 0.0
    %353 = vmatpush1.msra.mxu0 0.0
    %354 = vmatprep.subr.mxu0 0.0
    %355 = vmatpush1.msra.mxu0 0.0
    %356 = vmatprep.subr.mxu0 0.0
    %357 = vmatpush1.msra.mxu0 0.0
    %358 = vmatprep.subr.mxu0 0.0
    %359 = vmatpush1.msra.mxu0 0.0
    %360 = vmatprep.subr.mxu0 0.0
    %361 = vmatpush1.msra.mxu0 0.0
    %362 = vmatprep.subr.mxu0 0.0
    %363 = vmatpush1.msra.mxu0 0.0
    %364 = vmatprep.subr.mxu0 0.0
    %365 = vmatpush1.msra.mxu0 0.0
    %366 = vmatprep.mubr.f32.mxu0 0.0
    %367 = vmatmul.mubr.f32.gmra.mrb[0].mxu0 %v294
    %v368 = vpop.f32.mrb[0].mxu0
    %v369 = vadd.f32 0.0, %v368
    %v370 = vpop.f32.mrb[0].mxu0
    %371 = vmatprep.mubr.f32.mxu0 0.0
    %372 = vmatmul.mubr.f32.gmra.mrb[0].mxu0 %v295
    %v373 = vpop.f32.mrb[0].mxu0
    %v374 = vadd.f32 0.0, %v373
    %v375 = vpop.f32.mrb[0].mxu0
    %376 = vmatprep.mubr.f32.mxu0 0.0
    %377 = vmatmul.mubr.f32.gmra.mrb[0].mxu0 %v296
    %v378 = vpop.f32.mrb[0].mxu0
    %v379 = vadd.f32 0.0, %v378
    %v380 = vpop.f32.mrb[0].mxu0
    %381 = vmatprep.mubr.f32.mxu0 0.0
    %382 = vmatmul.mubr.f32.gmra.mrb[0].mxu0 %v297
    %v383 = vpop.f32.mrb[0].mxu0
    %v384 = vadd.f32 0.0, %v383
    %v385 = vpop.f32.mrb[0].mxu0
    %386 = vmatprep.mubr.f32.mxu0 0.0
    %387 = vmatmul.mubr.f32.gmra.mrb[0].mxu0 %v298
    %v388 = vpop.f32.mrb[0].mxu0
    %v389 = vadd.f32 0.0, %v388
    %v390 = vpop.f32.mrb[0].mxu0
    %391 = vmatprep.mubr.f32.mxu0 0.0
    %392 = vmatmul.mubr.f32.gmra.mrb[0].mxu0 %v299
    %v393 = vpop.f32.mrb[0].mxu0
    %v394 = vadd.f32 0.0, %v393
    %v395 = vpop.f32.mrb[0].mxu0
    %396 = vmatprep.mubr.f32.mxu0 0.0
    %397 = vmatmul.mubr.f32.gmra.mrb[0].mxu0 %v300
    %v398 = vpop.f32.mrb[0].mxu0
    %v399 = vadd.f32 0.0, %v398
    %v400 = vpop.f32.mrb[0].mxu0
    %401 = vmatprep.mubr.f32.mxu0 0.0
    %402 = vmatmul.mubr.f32.gmra.mrb[0].mxu0 %v301
    %v403 = vpop.f32.mrb[0].mxu0
    %v404 = vadd.f32 0.0, %v403
    %v405 = vpop.f32.mrb[0].mxu0
    %406 = vdwg.mxu0
    %v407 = vld [vmem:[%s4] sm:$0xff]
    %v408 = vld [vmem:[%s4 + $0x8] sm:$0xff]
    %v409 = vld [vmem:[%s4 + $0x10] sm:$0xff]
    %v410 = vld [vmem:[%s4 + $0x18] sm:$0xff]
    %v412 = vsel %vm50, 0.0, 0
    %414 = vmatprep.subr.mxu0 0.0
    %415 = vmatpush1.msra.mxu0 %v407
    %416 = vmatprep.subr.mxu0 0.0
    %417 = vmatpush1.msra.mxu0 %v408
    %418 = vmatprep.subr.mxu0 0.0
    %419 = vmatpush1.msra.mxu0 %v409
    %420 = vmatprep.subr.mxu0 0.0
    %421 = vmatpush1.msra.mxu0 %v410
    %422 = vmatprep.subr.mxu0 0.0
    %423 = vmatpush1.msra.mxu0 0.0
    %424 = vmatprep.subr.mxu0 0.0
    %425 = vmatpush1.msra.mxu0 0.0
    %426 = vmatprep.subr.mxu0 0.0
    %427 = vmatpush1.msra.mxu0 0.0
    %428 = vmatprep.subr.mxu0 0.0
    %429 = vmatpush1.msra.mxu0 0.0
    %430 = vmatprep.subr.mxu0 0.0
    %431 = vmatpush1.msra.mxu0 0.0
    %432 = vmatprep.subr.mxu0 0.0
    %433 = vmatpush1.msra.mxu0 0.0
    %434 = vmatprep.subr.mxu0 0.0
    %435 = vmatpush1.msra.mxu0 0.0
    %436 = vmatprep.subr.mxu0 0.0
    %437 = vmatpush1.msra.mxu0 0.0
    %438 = vmatprep.subr.mxu0 0.0
    %439 = vmatpush1.msra.mxu0 0.0
    %440 = vmatprep.subr.mxu0 0.0
    %441 = vmatpush1.msra.mxu0 0.0
    %442 = vmatprep.subr.mxu0 0.0
    %443 = vmatpush1.msra.mxu0 0.0
    %444 = vmatprep.subr.mxu0 0.0
    %445 = vmatpush1.msra.mxu0 0.0
    %446 = vmatprep.subr.mxu0 0.0
    %447 = vmatpush1.msra.mxu0 0.0
    %448 = vmatprep.subr.mxu0 0.0
    %449 = vmatpush1.msra.mxu0 0.0
    %450 = vmatprep.subr.mxu0 0.0
    %451 = vmatpush1.msra.mxu0 0.0
    %452 = vmatprep.subr.mxu0 0.0
    %453 = vmatpush1.msra.mxu0 0.0
    %454 = vmatprep.subr.mxu0 0.0
    %455 = vmatpush1.msra.mxu0 0.0
    %456 = vmatprep.subr.mxu0 0.0
    %457 = vmatpush1.msra.mxu0 0.0
    %458 = vmatprep.subr.mxu0 0.0
    %459 = vmatpush1.msra.mxu0 0.0
    %460 = vmatprep.subr.mxu0 0.0
    %461 = vmatpush1.msra.mxu0 0.0
    %462 = vmatprep.subr.mxu0 0.0
    %463 = vmatpush1.msra.mxu0 0.0
    %464 = vmatprep.subr.mxu0 0.0
    %465 = vmatpush1.msra.mxu0 0.0
    %466 = vmatprep.subr.mxu0 0.0
    %467 = vmatpush1.msra.mxu0 0.0
    %468 = vmatprep.subr.mxu0 0.0
    %469 = vmatpush1.msra.mxu0 0.0
    %470 = vmatprep.subr.mxu0 0.0
    %471 = vmatpush1.msra.mxu0 0.0
    %472 = vmatprep.subr.mxu0 0.0
    %473 = vmatpush1.msra.mxu0 0.0
    %474 = vmatprep.subr.mxu0 0.0
    %475 = vmatpush1.msra.mxu0 0.0
    %476 = vmatprep.subr.mxu0 0.0
    %477 = vmatpush1.msra.mxu0 0.0
    %478 = vmatprep.mubr.f32.mxu0 0.0
    %479 = vmatmul.mubr.f32.gmra.mrb[0].mxu0 %v412
    %v480 = vpop.f32.mrb[0].mxu0
    %v481 = vadd.f32 0.0, %v480
    %v482 = vpop.f32.mrb[0].mxu0
    %483 = vdwg.mxu0
    %v484 = vadd.f32 %v369, %v481
    %v485 = vxor.u32 %v484, 2147483648
    %v486 = vmul.f32 %v485, 1.442695
    %v487 = vpow.pop %v486
    %v488 = vadd.f32 %v487, 1.0
    %v489 = vrcp.pop %v488
    %v490 = vmul.f32 1.0, %v489
    %v491 = vtanh.pop %v484
    %v492 = vmul.f32 %v490, 0.0
    %494 = vrot.lane.b32.xlu0 %v491, 64
    %v495 = vpop.permute.xlu0 %494
    %v497 = vmul.f32 %v490, %v495
    %499 = vrot.lane.b32.xlu0 %v497, 32
    %v500 = vpop.permute.xlu0 %499
    %v502 = vadd.f32 %v492, %v500
    %v503 = vtanh.pop %v502
    %505 = vrot.lane.b32.xlu0 %v503, 64
    %v506 = vpop.permute.xlu0 %505
    %v508 = vmul.f32 %v490, %v506
    %510 = vrot.lane.b32.xlu0 %v508, 32
    %v511 = vpop.permute.xlu0 %510
    %513 = vst.msk [vmem:[%s5] sm:$0xff] %vm50, %v511
    %v514 = vsel %vm50, %v511, 0
    %516 = vmatprep.subr.mxu0 0.0
    %517 = vmatpush1.msra.mxu0 %v407
    %518 = vmatprep.subr.mxu0 0.0
    %519 = vmatpush1.msra.mxu0 %v408
    %520 = vmatprep.subr.mxu0 0.0
    %521 = vmatpush1.msra.mxu0 %v409
    %522 = vmatprep.subr.mxu0 0.0
    %523 = vmatpush1.msra.mxu0 %v410
    %524 = vmatprep.subr.mxu0 0.0
    %525 = vmatpush1.msra.mxu0 0.0
    %526 = vmatprep.subr.mxu0 0.0
    %527 = vmatpush1.msra.mxu0 0.0
    %528 = vmatprep.subr.mxu0 0.0
    %529 = vmatpush1.msra.mxu0 0.0
    %530 = vmatprep.subr.mxu0 0.0
    %531 = vmatpush1.msra.mxu0 0.0
    %532 = vmatprep.subr.mxu0 0.0
    %533 = vmatpush1.msra.mxu0 0.0
    %534 = vmatprep.subr.mxu0 0.0
    %535 = vmatpush1.msra.mxu0 0.0
    %536 = vmatprep.subr.mxu0 0.0
    %537 = vmatpush1.msra.mxu0 0.0
    %538 = vmatprep.subr.mxu0 0.0
    %539 = vmatpush1.msra.mxu0 0.0
    %540 = vmatprep.subr.mxu0 0.0
    %541 = vmatpush1.msra.mxu0 0.0
    %542 = vmatprep.subr.mxu0 0.0
    %543 = vmatpush1.msra.mxu0 0.0
    %544 = vmatprep.subr.mxu0 0.0
    %545 = vmatpush1.msra.mxu0 0.0
    %546 = vmatprep.subr.mxu0 0.0
    %547 = vmatpush1.msra.mxu0 0.0
    %548 = vmatprep.subr.mxu0 0.0
    %549 = vmatpush1.msra.mxu0 0.0
    %550 = vmatprep.subr.mxu0 0.0
    %551 = vmatpush1.msra.mxu0 0.0
    %552 = vmatprep.subr.mxu0 0.0
    %553 = vmatpush1.msra.mxu0 0.0
    %554 = vmatprep.subr.mxu0 0.0
    %555 = vmatpush1.msra.mxu0 0.0
    %556 = vmatprep.subr.mxu0 0.0
    %557 = vmatpush1.msra.mxu0 0.0
    %558 = vmatprep.subr.mxu0 0.0
    %559 = vmatpush1.msra.mxu0 0.0
    %560 = vmatprep.subr.mxu0 0.0
    %561 = vmatpush1.msra.mxu0 0.0
    %562 = vmatprep.subr.mxu0 0.0
    %563 = vmatpush1.msra.mxu0 0.0
    %564 = vmatprep.subr.mxu0 0.0
    %565 = vmatpush1.msra.mxu0 0.0
    %566 = vmatprep.subr.mxu0 0.0
    %567 = vmatpush1.msra.mxu0 0.0
    %568 = vmatprep.subr.mxu0 0.0
    %569 = vmatpush1.msra.mxu0 0.0
    %570 = vmatprep.subr.mxu0 0.0
    %571 = vmatpush1.msra.mxu0 0.0
    %572 = vmatprep.subr.mxu0 0.0
    %573 = vmatpush1.msra.mxu0 0.0
    %574 = vmatprep.subr.mxu0 0.0
    %575 = vmatpush1.msra.mxu0 0.0
    %576 = vmatprep.subr.mxu0 0.0
    %577 = vmatpush1.msra.mxu0 0.0
    %578 = vmatprep.subr.mxu0 0.0
    %579 = vmatpush1.msra.mxu0 0.0
    %580 = vmatprep.mubr.f32.mxu0 0.0
    %581 = vmatmul.mubr.f32.gmra.mrb[0].mxu0 %v514
    %v582 = vpop.f32.mrb[0].mxu0
    %v583 = vadd.f32 0.0, %v582
    %v584 = vpop.f32.mrb[0].mxu0
    %585 = vdwg.mxu0
    %v586 = vadd.f32 %v374, %v583
    %v587 = vxor.u32 %v586, 2147483648
    %v588 = vmul.f32 %v587, 1.442695
    %v589 = vpow.pop %v588
    %v590 = vadd.f32 %v589, 1.0
    %v591 = vrcp.pop %v590
    %v592 = vmul.f32 1.0, %v591
    %v593 = vtanh.pop %v586
    %v594 = vmul.f32 %v592, %v502
    %596 = vrot.lane.b32.xlu0 %v593, 64
    %v597 = vpop.permute.xlu0 %596
    %v599 = vmul.f32 %v592, %v597
    %601 = vrot.lane.b32.xlu0 %v599, 32
    %v602 = vpop.permute.xlu0 %601
    %v604 = vadd.f32 %v594, %v602
    %v605 = vtanh.pop %v604
    %607 = vrot.lane.b32.xlu0 %v605, 64
    %v608 = vpop.permute.xlu0 %607
    %v610 = vmul.f32 %v592, %v608
    %612 = vrot.lane.b32.xlu0 %v610, 32
    %v613 = vpop.permute.xlu0 %612
    %s615 = scalar_lea.vmem %s5, 8
    %616 = vst.msk [vmem:[%s615] sm:$0xff] %vm50, %v613
    %v617 = vsel %vm50, %v613, 0
    %619 = vmatprep.subr.mxu0 0.0
    %620 = vmatpush1.msra.mxu0 %v407
    %621 = vmatprep.subr.mxu0 0.0
    %622 = vmatpush1.msra.mxu0 %v408
    %623 = vmatprep.subr.mxu0 0.0
    %624 = vmatpush1.msra.mxu0 %v409
    %625 = vmatprep.subr.mxu0 0.0
    %626 = vmatpush1.msra.mxu0 %v410
    %627 = vmatprep.subr.mxu0 0.0
    %628 = vmatpush1.msra.mxu0 0.0
    %629 = vmatprep.subr.mxu0 0.0
    %630 = vmatpush1.msra.mxu0 0.0
    %631 = vmatprep.subr.mxu0 0.0
    %632 = vmatpush1.msra.mxu0 0.0
    %633 = vmatprep.subr.mxu0 0.0
    %634 = vmatpush1.msra.mxu0 0.0
    %635 = vmatprep.subr.mxu0 0.0
    %636 = vmatpush1.msra.mxu0 0.0
    %637 = vmatprep.subr.mxu0 0.0
    %638 = vmatpush1.msra.mxu0 0.0
    %639 = vmatprep.subr.mxu0 0.0
    %640 = vmatpush1.msra.mxu0 0.0
    %641 = vmatprep.subr.mxu0 0.0
    %642 = vmatpush1.msra.mxu0 0.0
    %643 = vmatprep.subr.mxu0 0.0
    %644 = vmatpush1.msra.mxu0 0.0
    %645 = vmatprep.subr.mxu0 0.0
    %646 = vmatpush1.msra.mxu0 0.0
    %647 = vmatprep.subr.mxu0 0.0
    %648 = vmatpush1.msra.mxu0 0.0
    %649 = vmatprep.subr.mxu0 0.0
    %650 = vmatpush1.msra.mxu0 0.0
    %651 = vmatprep.subr.mxu0 0.0
    %652 = vmatpush1.msra.mxu0 0.0
    %653 = vmatprep.subr.mxu0 0.0
    %654 = vmatpush1.msra.mxu0 0.0
    %655 = vmatprep.subr.mxu0 0.0
    %656 = vmatpush1.msra.mxu0 0.0
    %657 = vmatprep.subr.mxu0 0.0
    %658 = vmatpush1.msra.mxu0 0.0
    %659 = vmatprep.subr.mxu0 0.0
    %660 = vmatpush1.msra.mxu0 0.0
    %661 = vmatprep.subr.mxu0 0.0
    %662 = vmatpush1.msra.mxu0 0.0
    %663 = vmatprep.subr.mxu0 0.0
    %664 = vmatpush1.msra.mxu0 0.0
    %665 = vmatprep.subr.mxu0 0.0
    %666 = vmatpush1.msra.mxu0 0.0
    %667 = vmatprep.subr.mxu0 0.0
    %668 = vmatpush1.msra.mxu0 0.0
    %669 = vmatprep.subr.mxu0 0.0
    %670 = vmatpush1.msra.mxu0 0.0
    %671 = vmatprep.subr.mxu0 0.0
    %672 = vmatpush1.msra.mxu0 0.0
    %673 = vmatprep.subr.mxu0 0.0
    %674 = vmatpush1.msra.mxu0 0.0
    %675 = vmatprep.subr.mxu0 0.0
    %676 = vmatpush1.msra.mxu0 0.0
    %677 = vmatprep.subr.mxu0 0.0
    %678 = vmatpush1.msra.mxu0 0.0
    %679 = vmatprep.subr.mxu0 0.0
    %680 = vmatpush1.msra.mxu0 0.0
    %681 = vmatprep.subr.mxu0 0.0
    %682 = vmatpush1.msra.mxu0 0.0
    %683 = vmatprep.mubr.f32.mxu0 0.0
    %684 = vmatmul.mubr.f32.gmra.mrb[0].mxu0 %v617
    %v685 = vpop.f32.mrb[0].mxu0
    %v686 = vadd.f32 0.0, %v685
    %v687 = vpop.f32.mrb[0].mxu0
    %688 = vdwg.mxu0
    %v689 = vadd.f32 %v379, %v686
    %v690 = vxor.u32 %v689, 2147483648
    %v691 = vmul.f32 %v690, 1.442695
    %v692 = vpow.pop %v691
    %v693 = vadd.f32 %v692, 1.0
    %v694 = vrcp.pop %v693
    %v695 = vmul.f32 1.0, %v694
    %v696 = vtanh.pop %v689
    %v697 = vmul.f32 %v695, %v604
    %699 = vrot.lane.b32.xlu0 %v696, 64
    %v700 = vpop.permute.xlu0 %699
    %v702 = vmul.f32 %v695, %v700
    %704 = vrot.lane.b32.xlu0 %v702, 32
    %v705 = vpop.permute.xlu0 %704
    %v707 = vadd.f32 %v697, %v705
    %v708 = vtanh.pop %v707
    %710 = vrot.lane.b32.xlu0 %v708, 64
    %v711 = vpop.permute.xlu0 %710
    %v713 = vmul.f32 %v695, %v711
    %715 = vrot.lane.b32.xlu0 %v713, 32
    %v716 = vpop.permute.xlu0 %715
    %s718 = scalar_lea.vmem %s5, 16
    %719 = vst.msk [vmem:[%s718] sm:$0xff] %vm50, %v716
    %v720 = vsel %vm50, %v716, 0
    %722 = vmatprep.subr.mxu0 0.0
    %723 = vmatpush1.msra.mxu0 %v407
    %724 = vmatprep.subr.mxu0 0.0
    %725 = vmatpush1.msra.mxu0 %v408
    %726 = vmatprep.subr.mxu0 0.0
    %727 = vmatpush1.msra.mxu0 %v409
    %728 = vmatprep.subr.mxu0 0.0
    %729 = vmatpush1.msra.mxu0 %v410
    %730 = vmatprep.subr.mxu0 0.0
    %731 = vmatpush1.msra.mxu0 0.0
    %732 = vmatprep.subr.mxu0 0.0
    %733 = vmatpush1.msra.mxu0 0.0
    %734 = vmatprep.subr.mxu0 0.0
    %735 = vmatpush1.msra.mxu0 0.0
    %736 = vmatprep.subr.mxu0 0.0
    %737 = vmatpush1.msra.mxu0 0.0
    %738 = vmatprep.subr.mxu0 0.0
    %739 = vmatpush1.msra.mxu0 0.0
    %740 = vmatprep.subr.mxu0 0.0
    %741 = vmatpush1.msra.mxu0 0.0
    %742 = vmatprep.subr.mxu0 0.0
    %743 = vmatpush1.msra.mxu0 0.0
    %744 = vmatprep.subr.mxu0 0.0
    %745 = vmatpush1.msra.mxu0 0.0
    %746 = vmatprep.subr.mxu0 0.0
    %747 = vmatpush1.msra.mxu0 0.0
    %748 = vmatprep.subr.mxu0 0.0
    %749 = vmatpush1.msra.mxu0 0.0
    %750 = vmatprep.subr.mxu0 0.0
    %751 = vmatpush1.msra.mxu0 0.0
    %752 = vmatprep.subr.mxu0 0.0
    %753 = vmatpush1.msra.mxu0 0.0
    %754 = vmatprep.subr.mxu0 0.0
    %755 = vmatpush1.msra.mxu0 0.0
    %756 = vmatprep.subr.mxu0 0.0
    %757 = vmatpush1.msra.mxu0 0.0
    %758 = vmatprep.subr.mxu0 0.0
    %759 = vmatpush1.msra.mxu0 0.0
    %760 = vmatprep.subr.mxu0 0.0
    %761 = vmatpush1.msra.mxu0 0.0
    %762 = vmatprep.subr.mxu0 0.0
    %763 = vmatpush1.msra.mxu0 0.0
    %764 = vmatprep.subr.mxu0 0.0
    %765 = vmatpush1.msra.mxu0 0.0
    %766 = vmatprep.subr.mxu0 0.0
    %767 = vmatpush1.msra.mxu0 0.0
    %768 = vmatprep.subr.mxu0 0.0
    %769 = vmatpush1.msra.mxu0 0.0
    %770 = vmatprep.subr.mxu0 0.0
    %771 = vmatpush1.msra.mxu0 0.0
    %772 = vmatprep.subr.mxu0 0.0
    %773 = vmatpush1.msra.mxu0 0.0
    %774 = vmatprep.subr.mxu0 0.0
    %775 = vmatpush1.msra.mxu0 0.0
    %776 = vmatprep.subr.mxu0 0.0
    %777 = vmatpush1.msra.mxu0 0.0
    %778 = vmatprep.subr.mxu0 0.0
    %779 = vmatpush1.msra.mxu0 0.0
    %780 = vmatprep.subr.mxu0 0.0
    %781 = vmatpush1.msra.mxu0 0.0
    %782 = vmatprep.subr.mxu0 0.0
    %783 = vmatpush1.msra.mxu0 0.0
    %784 = vmatprep.subr.mxu0 0.0
    %785 = vmatpush1.msra.mxu0 0.0
    %786 = vmatprep.mubr.f32.mxu0 0.0
    %787 = vmatmul.mubr.f32.gmra.mrb[0].mxu0 %v720
    %v788 = vpop.f32.mrb[0].mxu0
    %v789 = vadd.f32 0.0, %v788
    %v790 = vpop.f32.mrb[0].mxu0
    %791 = vdwg.mxu0
    %v792 = vadd.f32 %v384, %v789
    %v793 = vxor.u32 %v792, 2147483648
    %v794 = vmul.f32 %v793, 1.442695
    %v795 = vpow.pop %v794
    %v796 = vadd.f32 %v795, 1.0
    %v797 = vrcp.pop %v796
    %v798 = vmul.f32 1.0, %v797
    %v799 = vtanh.pop %v792
    %v800 = vmul.f32 %v798, %v707
    %802 = vrot.lane.b32.xlu0 %v799, 64
    %v803 = vpop.permute.xlu0 %802
    %v805 = vmul.f32 %v798, %v803
    %807 = vrot.lane.b32.xlu0 %v805, 32
    %v808 = vpop.permute.xlu0 %807
    %v810 = vadd.f32 %v800, %v808
    %v811 = vtanh.pop %v810
    %813 = vrot.lane.b32.xlu0 %v811, 64
    %v814 = vpop.permute.xlu0 %813
    %v816 = vmul.f32 %v798, %v814
    %818 = vrot.lane.b32.xlu0 %v816, 32
    %v819 = vpop.permute.xlu0 %818
    %s821 = scalar_lea.vmem %s5, 24
    %822 = vst.msk [vmem:[%s821] sm:$0xff] %vm50, %v819
    %v823 = vsel %vm50, %v819, 0
    %825 = vmatprep.subr.mxu0 0.0
    %826 = vmatpush1.msra.mxu0 %v407
    %827 = vmatprep.subr.mxu0 0.0
    %828 = vmatpush1.msra.mxu0 %v408
    %829 = vmatprep.subr.mxu0 0.0
    %830 = vmatpush1.msra.mxu0 %v409
    %831 = vmatprep.subr.mxu0 0.0
    %832 = vmatpush1.msra.mxu0 %v410
    %833 = vmatprep.subr.mxu0 0.0
    %834 = vmatpush1.msra.mxu0 0.0
    %835 = vmatprep.subr.mxu0 0.0
    %836 = vmatpush1.msra.mxu0 0.0
    %837 = vmatprep.subr.mxu0 0.0
    %838 = vmatpush1.msra.mxu0 0.0
    %839 = vmatprep.subr.mxu0 0.0
    %840 = vmatpush1.msra.mxu0 0.0
    %841 = vmatprep.subr.mxu0 0.0
    %842 = vmatpush1.msra.mxu0 0.0
    %843 = vmatprep.subr.mxu0 0.0
    %844 = vmatpush1.msra.mxu0 0.0
    %845 = vmatprep.subr.mxu0 0.0
    %846 = vmatpush1.msra.mxu0 0.0
    %847 = vmatprep.subr.mxu0 0.0
    %848 = vmatpush1.msra.mxu0 0.0
    %849 = vmatprep.subr.mxu0 0.0
    %850 = vmatpush1.msra.mxu0 0.0
    %851 = vmatprep.subr.mxu0 0.0
    %852 = vmatpush1.msra.mxu0 0.0
    %853 = vmatprep.subr.mxu0 0.0
    %854 = vmatpush1.msra.mxu0 0.0
    %855 = vmatprep.subr.mxu0 0.0
    %856 = vmatpush1.msra.mxu0 0.0
    %857 = vmatprep.subr.mxu0 0.0
    %858 = vmatpush1.msra.mxu0 0.0
    %859 = vmatprep.subr.mxu0 0.0
    %860 = vmatpush1.msra.mxu0 0.0
    %861 = vmatprep.subr.mxu0 0.0
    %862 = vmatpush1.msra.mxu0 0.0
    %863 = vmatprep.subr.mxu0 0.0
    %864 = vmatpush1.msra.mxu0 0.0
    %865 = vmatprep.subr.mxu0 0.0
    %866 = vmatpush1.msra.mxu0 0.0
    %867 = vmatprep.subr.mxu0 0.0
    %868 = vmatpush1.msra.mxu0 0.0
    %869 = vmatprep.subr.mxu0 0.0
    %870 = vmatpush1.msra.mxu0 0.0
    %871 = vmatprep.subr.mxu0 0.0
    %872 = vmatpush1.msra.mxu0 0.0
    %873 = vmatprep.subr.mxu0 0.0
    %874 = vmatpush1.msra.mxu0 0.0
    %875 = vmatprep.subr.mxu0 0.0
    %876 = vmatpush1.msra.mxu0 0.0
    %877 = vmatprep.subr.mxu0 0.0
    %878 = vmatpush1.msra.mxu0 0.0
    %879 = vmatprep.subr.mxu0 0.0
    %880 = vmatpush1.msra.mxu0 0.0
    %881 = vmatprep.subr.mxu0 0.0
    %882 = vmatpush1.msra.mxu0 0.0
    %883 = vmatprep.subr.mxu0 0.0
    %884 = vmatpush1.msra.mxu0 0.0
    %885 = vmatprep.subr.mxu0 0.0
    %886 = vmatpush1.msra.mxu0 0.0
    %887 = vmatprep.subr.mxu0 0.0
    %888 = vmatpush1.msra.mxu0 0.0
    %889 = vmatprep.mubr.f32.mxu0 0.0
    %890 = vmatmul.mubr.f32.gmra.mrb[0].mxu0 %v823
    %v891 = vpop.f32.mrb[0].mxu0
    %v892 = vadd.f32 0.0, %v891
    %v893 = vpop.f32.mrb[0].mxu0
    %894 = vdwg.mxu0
    %v895 = vadd.f32 %v389, %v892
    %v896 = vxor.u32 %v895, 2147483648
    %v897 = vmul.f32 %v896, 1.442695
    %v898 = vpow.pop %v897
    %v899 = vadd.f32 %v898, 1.0
    %v900 = vrcp.pop %v899
    %v901 = vmul.f32 1.0, %v900
    %v902 = vtanh.pop %v895
    %v903 = vmul.f32 %v901, %v810
    %905 = vrot.lane.b32.xlu0 %v902, 64
    %v906 = vpop.permute.xlu0 %905
    %v908 = vmul.f32 %v901, %v906
    %910 = vrot.lane.b32.xlu0 %v908, 32
    %v911 = vpop.permute.xlu0 %910
    %v913 = vadd.f32 %v903, %v911
    %v914 = vtanh.pop %v913
    %916 = vrot.lane.b32.xlu0 %v914, 64
    %v917 = vpop.permute.xlu0 %916
    %v919 = vmul.f32 %v901, %v917
    %921 = vrot.lane.b32.xlu0 %v919, 32
    %v922 = vpop.permute.xlu0 %921
    %s924 = scalar_lea.vmem %s5, 32
    %925 = vst.msk [vmem:[%s924] sm:$0xff] %vm50, %v922
    %v926 = vsel %vm50, %v922, 0
    %928 = vmatprep.subr.mxu0 0.0
    %929 = vmatpush1.msra.mxu0 %v407
    %930 = vmatprep.subr.mxu0 0.0
    %931 = vmatpush1.msra.mxu0 %v408
    %932 = vmatprep.subr.mxu0 0.0
    %933 = vmatpush1.msra.mxu0 %v409
    %934 = vmatprep.subr.mxu0 0.0
    %935 = vmatpush1.msra.mxu0 %v410
    %936 = vmatprep.subr.mxu0 0.0
    %937 = vmatpush1.msra.mxu0 0.0
    %938 = vmatprep.subr.mxu0 0.0
    %939 = vmatpush1.msra.mxu0 0.0
    %940 = vmatprep.subr.mxu0 0.0
    %941 = vmatpush1.msra.mxu0 0.0
    %942 = vmatprep.subr.mxu0 0.0
    %943 = vmatpush1.msra.mxu0 0.0
    %944 = vmatprep.subr.mxu0 0.0
    %945 = vmatpush1.msra.mxu0 0.0
    %946 = vmatprep.subr.mxu0 0.0
    %947 = vmatpush1.msra.mxu0 0.0
    %948 = vmatprep.subr.mxu0 0.0
    %949 = vmatpush1.msra.mxu0 0.0
    %950 = vmatprep.subr.mxu0 0.0
    %951 = vmatpush1.msra.mxu0 0.0
    %952 = vmatprep.subr.mxu0 0.0
    %953 = vmatpush1.msra.mxu0 0.0
    %954 = vmatprep.subr.mxu0 0.0
    %955 = vmatpush1.msra.mxu0 0.0
    %956 = vmatprep.subr.mxu0 0.0
    %957 = vmatpush1.msra.mxu0 0.0
    %958 = vmatprep.subr.mxu0 0.0
    %959 = vmatpush1.msra.mxu0 0.0
    %960 = vmatprep.subr.mxu0 0.0
    %961 = vmatpush1.msra.mxu0 0.0
    %962 = vmatprep.subr.mxu0 0.0
    %963 = vmatpush1.msra.mxu0 0.0
    %964 = vmatprep.subr.mxu0 0.0
    %965 = vmatpush1.msra.mxu0 0.0
    %966 = vmatprep.subr.mxu0 0.0
    %967 = vmatpush1.msra.mxu0 0.0
    %968 = vmatprep.subr.mxu0 0.0
    %969 = vmatpush1.msra.mxu0 0.0
    %970 = vmatprep.subr.mxu0 0.0
    %971 = vmatpush1.msra.mxu0 0.0
    %972 = vmatprep.subr.mxu0 0.0
    %973 = vmatpush1.msra.mxu0 0.0
    %974 = vmatprep.subr.mxu0 0.0
    %975 = vmatpush1.msra.mxu0 0.0
    %976 = vmatprep.subr.mxu0 0.0
    %977 = vmatpush1.msra.mxu0 0.0
    %978 = vmatprep.subr.mxu0 0.0
    %979 = vmatpush1.msra.mxu0 0.0
    %980 = vmatprep.subr.mxu0 0.0
    %981 = vmatpush1.msra.mxu0 0.0
    %982 = vmatprep.subr.mxu0 0.0
    %983 = vmatpush1.msra.mxu0 0.0
    %984 = vmatprep.subr.mxu0 0.0
    %985 = vmatpush1.msra.mxu0 0.0
    %986 = vmatprep.subr.mxu0 0.0
    %987 = vmatpush1.msra.mxu0 0.0
    %988 = vmatprep.subr.mxu0 0.0
    %989 = vmatpush1.msra.mxu0 0.0
    %990 = vmatprep.subr.mxu0 0.0
    %991 = vmatpush1.msra.mxu0 0.0
    %992 = vmatprep.mubr.f32.mxu0 0.0
    %993 = vmatmul.mubr.f32.gmra.mrb[0].mxu0 %v926
    %v994 = vpop.f32.mrb[0].mxu0
    %v995 = vadd.f32 0.0, %v994
    %v996 = vpop.f32.mrb[0].mxu0
    %997 = vdwg.mxu0
    %v998 = vadd.f32 %v394, %v995
    %v999 = vxor.u32 %v998, 2147483648
    %v1000 = vmul.f32 %v999, 1.442695
    %v1001 = vpow.pop %v1000
    %v1002 = vadd.f32 %v1001, 1.0
    %v1003 = vrcp.pop %v1002
    %v1004 = vmul.f32 1.0, %v1003
    %v1005 = vtanh.pop %v998
    %v1006 = vmul.f32 %v1004, %v913
    %1008 = vrot.lane.b32.xlu0 %v1005, 64
    %v1009 = vpop.permute.xlu0 %1008
    %v1011 = vmul.f32 %v1004, %v1009
    %1013 = vrot.lane.b32.xlu0 %v1011, 32
    %v1014 = vpop.permute.xlu0 %1013
    %v1016 = vadd.f32 %v1006, %v1014
    %v1017 = vtanh.pop %v1016
    %1019 = vrot.lane.b32.xlu0 %v1017, 64
    %v1020 = vpop.permute.xlu0 %1019
    %v1022 = vmul.f32 %v1004, %v1020
    %1024 = vrot.lane.b32.xlu0 %v1022, 32
    %v1025 = vpop.permute.xlu0 %1024
    %s1027 = scalar_lea.vmem %s5, 40
    %1028 = vst.msk [vmem:[%s1027] sm:$0xff] %vm50, %v1025
    %v1029 = vsel %vm50, %v1025, 0
    %1031 = vmatprep.subr.mxu0 0.0
    %1032 = vmatpush1.msra.mxu0 %v407
    %1033 = vmatprep.subr.mxu0 0.0
    %1034 = vmatpush1.msra.mxu0 %v408
    %1035 = vmatprep.subr.mxu0 0.0
    %1036 = vmatpush1.msra.mxu0 %v409
    %1037 = vmatprep.subr.mxu0 0.0
    %1038 = vmatpush1.msra.mxu0 %v410
    %1039 = vmatprep.subr.mxu0 0.0
    %1040 = vmatpush1.msra.mxu0 0.0
    %1041 = vmatprep.subr.mxu0 0.0
    %1042 = vmatpush1.msra.mxu0 0.0
    %1043 = vmatprep.subr.mxu0 0.0
    %1044 = vmatpush1.msra.mxu0 0.0
    %1045 = vmatprep.subr.mxu0 0.0
    %1046 = vmatpush1.msra.mxu0 0.0
    %1047 = vmatprep.subr.mxu0 0.0
    %1048 = vmatpush1.msra.mxu0 0.0
    %1049 = vmatprep.subr.mxu0 0.0
    %1050 = vmatpush1.msra.mxu0 0.0
    %1051 = vmatprep.subr.mxu0 0.0
    %1052 = vmatpush1.msra.mxu0 0.0
    %1053 = vmatprep.subr.mxu0 0.0
    %1054 = vmatpush1.msra.mxu0 0.0
    %1055 = vmatprep.subr.mxu0 0.0
    %1056 = vmatpush1.msra.mxu0 0.0
    %1057 = vmatprep.subr.mxu0 0.0
    %1058 = vmatpush1.msra.mxu0 0.0
    %1059 = vmatprep.subr.mxu0 0.0
    %1060 = vmatpush1.msra.mxu0 0.0
    %1061 = vmatprep.subr.mxu0 0.0
    %1062 = vmatpush1.msra.mxu0 0.0
    %1063 = vmatprep.subr.mxu0 0.0
    %1064 = vmatpush1.msra.mxu0 0.0
    %1065 = vmatprep.subr.mxu0 0.0
    %1066 = vmatpush1.msra.mxu0 0.0
    %1067 = vmatprep.subr.mxu0 0.0
    %1068 = vmatpush1.msra.mxu0 0.0
    %1069 = vmatprep.subr.mxu0 0.0
    %1070 = vmatpush1.msra.mxu0 0.0
    %1071 = vmatprep.subr.mxu0 0.0
    %1072 = vmatpush1.msra.mxu0 0.0
    %1073 = vmatprep.subr.mxu0 0.0
    %1074 = vmatpush1.msra.mxu0 0.0
    %1075 = vmatprep.subr.mxu0 0.0
    %1076 = vmatpush1.msra.mxu0 0.0
    %1077 = vmatprep.subr.mxu0 0.0
    %1078 = vmatpush1.msra.mxu0 0.0
    %1079 = vmatprep.subr.mxu0 0.0
    %1080 = vmatpush1.msra.mxu0 0.0
    %1081 = vmatprep.subr.mxu0 0.0
    %1082 = vmatpush1.msra.mxu0 0.0
    %1083 = vmatprep.subr.mxu0 0.0
    %1084 = vmatpush1.msra.mxu0 0.0
    %1085 = vmatprep.subr.mxu0 0.0
    %1086 = vmatpush1.msra.mxu0 0.0
    %1087 = vmatprep.subr.mxu0 0.0
    %1088 = vmatpush1.msra.mxu0 0.0
    %1089 = vmatprep.subr.mxu0 0.0
    %1090 = vmatpush1.msra.mxu0 0.0
    %1091 = vmatprep.subr.mxu0 0.0
    %1092 = vmatpush1.msra.mxu0 0.0
    %1093 = vmatprep.subr.mxu0 0.0
    %1094 = vmatpush1.msra.mxu0 0.0
    %1095 = vmatprep.mubr.f32.mxu0 0.0
    %1096 = vmatmul.mubr.f32.gmra.mrb[0].mxu0 %v1029
    %v1097 = vpop.f32.mrb[0].mxu0
    %v1098 = vadd.f32 0.0, %v1097
    %v1099 = vpop.f32.mrb[0].mxu0
    %1100 = vdwg.mxu0
    %v1101 = vadd.f32 %v399, %v1098
    %v1102 = vxor.u32 %v1101, 2147483648
    %v1103 = vmul.f32 %v1102, 1.442695
    %v1104 = vpow.pop %v1103
    %v1105 = vadd.f32 %v1104, 1.0
    %v1106 = vrcp.pop %v1105
    %v1107 = vmul.f32 1.0, %v1106
    %v1108 = vtanh.pop %v1101
    %v1109 = vmul.f32 %v1107, %v1016
    %1111 = vrot.lane.b32.xlu0 %v1108, 64
    %v1112 = vpop.permute.xlu0 %1111
    %v1114 = vmul.f32 %v1107, %v1112
    %1116 = vrot.lane.b32.xlu0 %v1114, 32
    %v1117 = vpop.permute.xlu0 %1116
    %v1119 = vadd.f32 %v1109, %v1117
    %v1120 = vtanh.pop %v1119
    %1122 = vrot.lane.b32.xlu0 %v1120, 64
    %v1123 = vpop.permute.xlu0 %1122
    %v1125 = vmul.f32 %v1107, %v1123
    %1127 = vrot.lane.b32.xlu0 %v1125, 32
    %v1128 = vpop.permute.xlu0 %1127
    %s1130 = scalar_lea.vmem %s5, 48
    %1131 = vst.msk [vmem:[%s1130] sm:$0xff] %vm50, %v1128
    %v1132 = vsel %vm50, %v1128, 0
    %1134 = vmatprep.subr.mxu0 0.0
    %1135 = vmatpush1.msra.mxu0 %v407
    %1136 = vmatprep.subr.mxu0 0.0
    %1137 = vmatpush1.msra.mxu0 %v408
    %1138 = vmatprep.subr.mxu0 0.0
    %1139 = vmatpush1.msra.mxu0 %v409
    %1140 = vmatprep.subr.mxu0 0.0
    %1141 = vmatpush1.msra.mxu0 %v410
    %1142 = vmatprep.subr.mxu0 0.0
    %1143 = vmatpush1.msra.mxu0 0.0
    %1144 = vmatprep.subr.mxu0 0.0
    %1145 = vmatpush1.msra.mxu0 0.0
    %1146 = vmatprep.subr.mxu0 0.0
    %1147 = vmatpush1.msra.mxu0 0.0
    %1148 = vmatprep.subr.mxu0 0.0
    %1149 = vmatpush1.msra.mxu0 0.0
    %1150 = vmatprep.subr.mxu0 0.0
    %1151 = vmatpush1.msra.mxu0 0.0
    %1152 = vmatprep.subr.mxu0 0.0
    %1153 = vmatpush1.msra.mxu0 0.0
    %1154 = vmatprep.subr.mxu0 0.0
    %1155 = vmatpush1.msra.mxu0 0.0
    %1156 = vmatprep.subr.mxu0 0.0
    %1157 = vmatpush1.msra.mxu0 0.0
    %1158 = vmatprep.subr.mxu0 0.0
    %1159 = vmatpush1.msra.mxu0 0.0
    %1160 = vmatprep.subr.mxu0 0.0
    %1161 = vmatpush1.msra.mxu0 0.0
    %1162 = vmatprep.subr.mxu0 0.0
    %1163 = vmatpush1.msra.mxu0 0.0
    %1164 = vmatprep.subr.mxu0 0.0
    %1165 = vmatpush1.msra.mxu0 0.0
    %1166 = vmatprep.subr.mxu0 0.0
    %1167 = vmatpush1.msra.mxu0 0.0
    %1168 = vmatprep.subr.mxu0 0.0
    %1169 = vmatpush1.msra.mxu0 0.0
    %1170 = vmatprep.subr.mxu0 0.0
    %1171 = vmatpush1.msra.mxu0 0.0
    %1172 = vmatprep.subr.mxu0 0.0
    %1173 = vmatpush1.msra.mxu0 0.0
    %1174 = vmatprep.subr.mxu0 0.0
    %1175 = vmatpush1.msra.mxu0 0.0
    %1176 = vmatprep.subr.mxu0 0.0
    %1177 = vmatpush1.msra.mxu0 0.0
    %1178 = vmatprep.subr.mxu0 0.0
    %1179 = vmatpush1.msra.mxu0 0.0
    %1180 = vmatprep.subr.mxu0 0.0
    %1181 = vmatpush1.msra.mxu0 0.0
    %1182 = vmatprep.subr.mxu0 0.0
    %1183 = vmatpush1.msra.mxu0 0.0
    %1184 = vmatprep.subr.mxu0 0.0
    %1185 = vmatpush1.msra.mxu0 0.0
    %1186 = vmatprep.subr.mxu0 0.0
    %1187 = vmatpush1.msra.mxu0 0.0
    %1188 = vmatprep.subr.mxu0 0.0
    %1189 = vmatpush1.msra.mxu0 0.0
    %1190 = vmatprep.subr.mxu0 0.0
    %1191 = vmatpush1.msra.mxu0 0.0
    %1192 = vmatprep.subr.mxu0 0.0
    %1193 = vmatpush1.msra.mxu0 0.0
    %1194 = vmatprep.subr.mxu0 0.0
    %1195 = vmatpush1.msra.mxu0 0.0
    %1196 = vmatprep.subr.mxu0 0.0
    %1197 = vmatpush1.msra.mxu0 0.0
    %1198 = vmatprep.mubr.f32.mxu0 0.0
    %1199 = vmatmul.mubr.f32.gmra.mrb[0].mxu0 %v1132
    %v1200 = vpop.f32.mrb[0].mxu0
    %v1201 = vadd.f32 0.0, %v1200
    %v1202 = vpop.f32.mrb[0].mxu0
    %1203 = vdwg.mxu0
    %v1204 = vadd.f32 %v404, %v1201
    %v1205 = vxor.u32 %v1204, 2147483648
    %v1206 = vmul.f32 %v1205, 1.442695
    %v1207 = vpow.pop %v1206
    %v1208 = vadd.f32 %v1207, 1.0
    %v1209 = vrcp.pop %v1208
    %v1210 = vmul.f32 1.0, %v1209
    %v1211 = vtanh.pop %v1204
    %v1212 = vmul.f32 %v1210, %v1119
    %1214 = vrot.lane.b32.xlu0 %v1211, 64
    %v1215 = vpop.permute.xlu0 %1214
    %v1217 = vmul.f32 %v1210, %v1215
    %1219 = vrot.lane.b32.xlu0 %v1217, 32
    %v1220 = vpop.permute.xlu0 %1219
    %v1222 = vadd.f32 %v1212, %v1220
    %v1223 = vtanh.pop %v1222
    %1225 = vrot.lane.b32.xlu0 %v1223, 64
    %v1226 = vpop.permute.xlu0 %1225
    %v1228 = vmul.f32 %v1210, %v1226
    %1230 = vrot.lane.b32.xlu0 %v1228, 32
    %v1231 = vpop.permute.xlu0 %1230
    %s1233 = scalar_lea.vmem %s5, 56
    %1234 = vst.msk [vmem:[%s1233] sm:$0xff] %vm50, %v1231
    %1236 = vrot.lane.b32.xlu0 %v1222, 96
    %v1237 = vpop.permute.xlu0 %1236
    %1239 = vst.msk [vmem:[#allocation2] sm:$0xff] %vm50, %v1237
    // Predicated region
    $region22: #{encoder_forward.1} parent=1 // pred_check
      _
    $region23: #{encoder_forward.1} parent=1 // pred_check_branch
      %1241 = sbr.rel (0) target = $region25
    $region24: #{encoder_forward.1} parent=1 // pred_region
      _
    $region25: #{encoder_forward.1} parent=1 // pred_fallthru
      _
    // Predicated region
    $region26: #{encoder_forward.1} parent=1 // pred_check
      _
    $region27: #{encoder_forward.1} parent=1 // pred_check_branch
      %1243 = sbr.rel (0) target = $region29
    $region28: #{encoder_forward.1} parent=1 // pred_region
      %s1245 = ssub.s32 128, 128
      %1246 = vsyncadd [#allocation3], %s1245
      %s1248 = sshll.u32 [#allocation2], 4
      %s1249 = int_to_ptr.vmem [resolvable:$true] %s1248
      %1251 = dma.vmem_to_hbm [thread:$0]  %s1249, 128, %s6, [#allocation3]
    $region29: #{encoder_forward.1} parent=1 // pred_fallthru
      _
    // Predicated region
    $region30: #{encoder_forward.1} parent=1 // pred_check
      _
    $region31: #{encoder_forward.1} parent=1 // pred_check_branch
      %1253 = sbr.rel (0) target = $region33
    $region32: #{encoder_forward.1} parent=1 // pred_region
      _
    $region33: #{encoder_forward.1} parent=1 // pred_fallthru
      _
    // Predicated region
    $region34: #{encoder_forward.1} parent=1 // pred_check
      _
    $region35: #{encoder_forward.1} parent=1 // pred_check_branch
      %1255 = sbr.rel (0) target = $region37
    $region36: #{encoder_forward.1} parent=1 // pred_region
      %1256 = dma.done [#allocation3], 128
    $region37: #{encoder_forward.1} parent=1 // pred_fallthru
      _
    %1257 = vsyncpa [#allocation3], 1

</llo_original>
